<compile_context>
chip_gen: v7x
topology: tpu7x:2x2x1
jax: 0.10.0
libtpu: 0.0.40
codegen_flags: <defaults>
</compile_context>

<pallas_src>
import jax
import jax.numpy as jnp
from jax.experimental import pallas as pl
from jax.experimental.pallas import tpu as pltpu


def _sigmoid(y):
    # Stable form: one EUP exp, no inf intermediate for strongly negative y.
    z = jnp.exp(-jnp.abs(y))
    return jnp.where(y >= 0, 1.0, z) / (1.0 + z)


def _make_targetnet_kernel(layer_meta):
    """layer_meta: tuple of (canvas_idx, co, ci, row0, transposed)."""
    n_layers = len(layer_meta)

    def kernel(x_ref, pa_ref, pb_ref, out_ref):
        # x_ref  : (TB, 1, C_in)    activations, channels on lanes ("row" form)
        # pa_ref : (TB, R1, L1)     wide canvas  (layer 1 only)
        # pb_ref : (TB, R2, L2)     narrow canvas (layers 2..5)
        # out_ref: (1, TB, out_dim) per-step scores
        refs = (pa_ref, pb_ref)
        q = x_ref[...].astype(jnp.float32)                               # (TB,1,Ci) row

        for li, (cidx, co, ci, r0, transposed) in enumerate(layer_meta):
            p_ref = refs[cidx]
            if not transposed:
                # W stored as (co, ci); bias stored in the extra lane `ci`.
                w = p_ref[:, r0:r0 + co, 0:ci].astype(jnp.float32)           # (TB,co,ci)
                b = p_ref[:, r0:r0 + co, ci:ci + 1].astype(jnp.float32)      # (TB,co,1)
                # q is a row (TB,1,ci): sublane-broadcast, lane-reduce (VPU+XLU).
                y = jnp.sum(w * q, axis=-1, keepdims=True) + b               # (TB,co,1)
            else:
                # W stored transposed as (ci, co); bias stored as an extra row.
                w = p_ref[:, r0:r0 + ci, 0:co].astype(jnp.float32)           # (TB,ci,co)
                b = p_ref[:, r0 + ci:r0 + ci + 1, 0:co].astype(jnp.float32)  # (TB,1,co)
                # q is a column (TB,ci,1): lane-broadcast, sublane-reduce.
                y = jnp.sum(w * q, axis=1, keepdims=True) + b                # (TB,1,co)
            q = _sigmoid(y) if li < n_layers - 1 else y

        # Final layer is even-indexed => q is (TB, out_dim, 1).  The output is
        # tiny (tb*out_dim*4 B/step), so store it directly (no lane packing).
        out_ref[0] = q[:, :, 0].astype(out_ref.dtype)                        # (TB,out_dim)

    return kernel


def pack_target_params(paras, batch, c_in, param_dtype):
    """Pack per-image FC weights + biases into TWO (B, R, L) canvases.

    Canvas 0 (wide):   layer 1 only, lane width = C_in + 1.
    Canvas 1 (narrow): layers 2..5 packed to their own max lane width.
    Odd layers are stored as W^T (rows = ci weight rows + 1 bias row) so the
    in-kernel activation alternates row/column orientation and no transpose or
    relayout happens inside the kernel.
    """
    dims = []
    for i in range(1, 6):
        w = paras[f'target_fc{i}w']
        dims.append((int(w.shape[1]), int(w.shape[2])))
    assert dims[0][1] == c_in, (dims, c_in)
    for (co_prev, _), (_, ci_next) in zip(dims[:-1], dims[1:]):
        assert co_prev == ci_next, dims

    # Sublane-tile-aligned layer starts (8 rows for f32, 16 for bf16, ...).
    itemsize = jnp.dtype(param_dtype).itemsize
    row_align = 8 * max(1, 4 // itemsize)

    def lane_w(li, co, ci):
        return ci + 1 if li % 2 == 0 else co

    groups = ([0], [1, 2, 3, 4])          # wide canvas / narrow canvas
    canvases, meta = [], []
    for gi, layer_ids in enumerate(groups):
        L = max(lane_w(li, *dims[li]) for li in layer_ids)
        pieces, row = [], 0
        for li in layer_ids:
            co, ci = dims[li]
            w = paras[f'target_fc{li + 1}w'].reshape(batch, co, ci).astype(jnp.float32)
            b = paras[f'target_fc{li + 1}b'].reshape(batch, co).astype(jnp.float32)
            if li % 2 == 0:
                # stored as-is: rows = co ; row o = [W[:, o, :], bias[:, o], 0...]
                blk = jnp.concatenate([w, b[:, :, None]], axis=2)        # (B, co, ci+1)
                blk = jnp.pad(blk, ((0, 0), (0, 0), (0, L - (ci + 1))))
                n_rows = co
            else:
                # stored transposed: rows = ci weight rows + 1 bias row
                wt = jnp.transpose(w, (0, 2, 1))                         # (B, ci, co)
                blk = jnp.concatenate([wt, b[:, None, :]], axis=1)       # (B, ci+1, co)
                blk = jnp.pad(blk, ((0, 0), (0, 0), (0, L - co)))
                n_rows = ci + 1
            pad_rows = (-n_rows) % row_align
            if pad_rows:
                blk = jnp.pad(blk, ((0, 0), (0, pad_rows), (0, 0)))
            meta.append((gi, co, ci, row, li % 2 == 1))
            pieces.append(blk)
            row += n_rows + pad_rows
        canvases.append(jnp.concatenate(pieces, axis=1).astype(param_dtype))
    return tuple(canvases), tuple(meta), dims[-1][0]


def _choose_tb(batch, tb):
    """Prefer a tb that divides B (no full-canvas jnp.pad in the wrapper).

    For v7x, callers should also keep ceil(B/tb) >= 2 so the 'parallel' grid
    axis can shard across both TensorCores (e.g. B=32 -> tb=16, not 32).
    """
    tb = max(1, min(tb, batch))
    if batch % tb == 0:
        return tb, False
    for cand in range(tb, 0, -1):
        if batch % cand == 0:
            if cand * 2 >= tb:            # divisor close enough to the request
                return cand, False
            break
    return tb, True                        # fall back to padding the last step


def target_net_forward(x, paras, *, tb=16, param_dtype=jnp.bfloat16, packed=None):
    """x: NCHW float32 (B, C_in, 1, 1); paras['target_fc{i}w']: (B, Co, Ci, 1, 1),
    paras['target_fc{i}b']: (B, Co).  Returns jnp.squeeze of (B, Co5, H, W).

    param_dtype=jnp.float32 gives bit-parity with the PyTorch module;
    the bfloat16 default halves param HBM traffic (~1e-3 deviation).
    """
    B, C_in, H, W = x.shape
    if H * W != 1:
        # TODO(synk): add a spatial tile axis for H*W > 1 feature maps.
        raise NotImplementedError("Pallas TargetNet kernel supports 1x1 spatial maps only.")

    if packed is None:
        packed = pack_target_params(paras, B, C_in, param_dtype)
    (canvas_a, canvas_b), meta, out_dim = packed
    R1, L1 = int(canvas_a.shape[1]), int(canvas_a.shape[2])
    R2, L2 = int(canvas_b.shape[1]), int(canvas_b.shape[2])

    tb, need_pad = _choose_tb(B, tb)
    G = -(-B // tb)                      # ceil(B / tb) grid steps
    B_pad = G * tb

    xr = x.reshape(B, 1, C_in).astype(jnp.float32)
    if need_pad and B_pad != B:
        # Fallback only: this materializes an extra HBM copy of the canvases.
        xr = jnp.pad(xr, ((0, B_pad - B), (0, 0), (0, 0)))
        canvas_a = jnp.pad(canvas_a, ((0, B_pad - B), (0, 0), (0, 0)))
        canvas_b = jnp.pad(canvas_b, ((0, B_pad - B), (0, 0), (0, 0)))

    kernel = _make_targetnet_kernel(meta)

    in_specs = [
        pl.BlockSpec((tb, 1, C_in), lambda g: (g, 0, 0)),   # activations
        pl.BlockSpec((tb, R1, L1), lambda g: (g, 0, 0)),    # wide canvas (layer 1)
        pl.BlockSpec((tb, R2, L2), lambda g: (g, 0, 0)),    # narrow canvas (layers 2-5)
    ]
    out_shape = jax.ShapeDtypeStruct((G, tb, out_dim), jnp.float32)
    out_specs = pl.BlockSpec((1, tb, out_dim), lambda g: (g, 0, 0))

    # Double-buffered per-step VMEM; override the scoped limit only when the
    # blocks approach v5e's 16 MiB default (large tb and/or f32 params).
    itemsize_p = jnp.dtype(param_dtype).itemsize
    block_bytes = (tb * C_in * 4
                   + tb * R1 * L1 * itemsize_p
                   + tb * R2 * L2 * itemsize_p
                   + tb * out_dim * 4)
    vmem_need = 2 * block_bytes
    compiler_kwargs = dict(dimension_semantics=("parallel",))
    if vmem_need > 12 * 1024 * 1024:
        compiler_kwargs["vmem_limit_bytes"] = int(min(48 * 1024 * 1024, 2 * vmem_need))

    out = pl.pallas_call(
        kernel,
        out_shape=out_shape,
        grid=(G,),
        in_specs=in_specs,
        out_specs=out_specs,
        compiler_params=pltpu.CompilerParams(**compiler_kwargs),
    )(xr, canvas_a, canvas_b)

    q_full = out.reshape(B_pad, out_dim)[:B].reshape(B, out_dim, H, W)
    return jnp.squeeze(q_full)                                   # mimics PyTorch .squeeze()


def target_net_ref(x, paras, param_dtype=jnp.float32):
    """Pure-JAX reference matching the PyTorch module (optionally with params
    quantized to param_dtype, mirroring what the kernel sees)."""
    B, C, H, W = x.shape
    q = x.reshape(B, C, H * W).astype(jnp.float32)               # (B, C, S)
    co = C
    for i in range(1, 6):
        w = paras[f'target_fc{i}w']
        bvec = paras[f'target_fc{i}b']
        co, ci = int(w.shape[1]), int(w.shape[2])
        w3 = w.reshape(B, co, ci).astype(param_dtype).astype(jnp.float32)
        b2 = bvec.reshape(B, co).astype(param_dtype).astype(jnp.float32)
        q = jnp.einsum('boi,bis->bos', w3, q) + b2[:, :, None]
        if i < 5:
            q = _sigmoid(q)
    return jnp.squeeze(q.reshape(B, co, H, W))


def make_paras(key, batch, in_dim, dims):
    """Deterministic synthetic per-image FC weights (same shapes as hyperIQA)."""
    paras = {}
    prev = in_dim
    for i, d in enumerate(dims, start=1):
        key, kw, kb = jax.random.split(key, 3)
        paras[f'target_fc{i}w'] = 0.1 * jax.random.normal(
            kw, (batch, d, prev, 1, 1), dtype=jnp.float32)
        paras[f'target_fc{i}b'] = 0.1 * jax.random.normal(
            kb, (batch, d), dtype=jnp.float32)
        prev = d
    return paras


if __name__ == "__main__":
    key = jax.random.PRNGKey(0)
    B, C_in, H, W = 32, 32, 1, 1               # hyperIQA feeds (B, 224, 1, 1); small here
    hidden_dims = (16, 16, 16, 8, 1)           # fc1..fc4 + final fc5 (out=1)

    key, kx = jax.random.split(key)
    x = jax.random.normal(kx, (B, C_in, H, W), dtype=jnp.float32)
    paras = make_paras(key, B, C_in, hidden_dims)

    # float32 params: exact semantics of the PyTorch module.
    # tb=16 -> G=2 grid steps (keeps both v7x TensorCores busy), no padding.
    out_f32 = jax.block_until_ready(
        target_net_forward(x, paras, tb=16, param_dtype=jnp.float32))
    ref_f32 = target_net_ref(x, paras, jnp.float32)
    assert out_f32.shape == ref_f32.shape, (out_f32.shape, ref_f32.shape)
    assert jnp.allclose(out_f32, ref_f32, atol=1e-5, rtol=1e-5), (out_f32, ref_f32)

    # default path: bfloat16 params (halves HBM weight traffic), f32 arithmetic.
    out_bf16 = jax.block_until_ready(target_net_forward(x, paras, tb=16))
    ref_bf16 = target_net_ref(x, paras, jnp.bfloat16)
    assert jnp.allclose(out_bf16, ref_bf16, atol=1e-4, rtol=1e-4), (out_bf16, ref_bf16)
    assert jnp.allclose(out_bf16, ref_f32, atol=5e-2, rtol=5e-2)

    # odd batch exercises the divisor-selection path (no wrapper-side jnp.pad).
    out_odd = jax.block_until_ready(
        target_net_forward(x[:24], {k: v[:24] for k, v in paras.items()},
                           tb=16, param_dtype=jnp.float32))
    ref_odd = target_net_ref(x[:24], {k: v[:24] for k, v in paras.items()}, jnp.float32)
    assert jnp.allclose(out_odd, ref_odd, atol=1e-5, rtol=1e-5)

    print("KERNEL_OK")
</pallas_src>

<mosaic_0001>
module attributes {stable_mosaic.version = 11 : i64} {
  func.func @kernel(%arg0: i32, %arg1: memref<16x1x32xf32, #tpu.memory_space<vmem>>, %arg2: memref<16x16x33xf32, #tpu.memory_space<vmem>>, %arg3: memref<16x72x17xf32, #tpu.memory_space<vmem>>, %arg4: memref<1x16x1xf32, #tpu.memory_space<vmem>>) attributes {dimension_semantics = [#tpu.dimension_semantics<parallel>], iteration_bounds = array<i64: 2>, scalar_prefetch = 0 : i64, scratch_operands = 0 : i64, tpu.core_type = #tpu.core_type<tc>, window_params = [{transform_indices = @transform_0, window_bounds = array<i64: 16, 1, 32>}, {transform_indices = @transform_1, window_bounds = array<i64: 16, 16, 33>}, {transform_indices = @transform_2, window_bounds = array<i64: 16, 72, 17>}, {transform_indices = @transform_3, window_bounds = array<i64: 1, 16, 1>}]} {
    %c0 = arith.constant 0 : index
    %c0_0 = arith.constant 0 : index
    %c0_1 = arith.constant 0 : index
    %0 = vector.load %arg1[%c0, %c0_0, %c0_1] : memref<16x1x32xf32, #tpu.memory_space<vmem>>, vector<16x1x32xf32>
    %c0_2 = arith.constant 0 : index
    %c0_3 = arith.constant 0 : index
    %c0_4 = arith.constant 0 : index
    %1 = vector.load %arg2[%c0_2, %c0_3, %c0_4] : memref<16x16x33xf32, #tpu.memory_space<vmem>>, vector<16x16x32xf32>
    %c0_5 = arith.constant 0 : index
    %c0_6 = arith.constant 0 : index
    %c32 = arith.constant 32 : index
    %2 = vector.load %arg2[%c0_5, %c0_6, %c32] : memref<16x16x33xf32, #tpu.memory_space<vmem>>, vector<16x16x1xf32>
    %3 = vector.broadcast %0 : vector<16x1x32xf32> to vector<16x16x32xf32>
    %4 = arith.mulf %1, %3 : vector<16x16x32xf32>
    %cst = arith.constant dense<0.000000e+00> : vector<16x16xf32>
    %5 = vector.multi_reduction <add>, %4, %cst [2] : vector<16x16x32xf32> to vector<16x16xf32>
    %6 = vector.shape_cast %5 : vector<16x16xf32> to vector<16x16x1xf32>
    %7 = arith.addf %6, %2 : vector<16x16x1xf32>
    %8 = math.absf %7 : vector<16x16x1xf32>
    %cst_7 = arith.constant 0.000000e+00 : f32
    %9 = vector.broadcast %cst_7 : f32 to vector<16x16x1xf32>
    %10 = arith.subf %9, %8 : vector<16x16x1xf32>
    %11 = math.exp %10 : vector<16x16x1xf32>
    %cst_8 = arith.constant 0.000000e+00 : f32
    %12 = vector.broadcast %cst_8 : f32 to vector<16x16x1xf32>
    %13 = arith.cmpf oge, %7, %12 : vector<16x16x1xf32>
    %cst_9 = arith.constant 1.000000e+00 : f32
    %14 = vector.broadcast %cst_9 : f32 to vector<16x16x1xf32>
    %15 = arith.select %13, %14, %11 : vector<16x16x1xi1>, vector<16x16x1xf32>
    %cst_10 = arith.constant 1.000000e+00 : f32
    %16 = vector.broadcast %cst_10 : f32 to vector<16x16x1xf32>
    %17 = arith.addf %16, %11 : vector<16x16x1xf32>
    %18 = arith.divf %15, %17 : vector<16x16x1xf32>
    %c0_11 = arith.constant 0 : index
    %c0_12 = arith.constant 0 : index
    %c0_13 = arith.constant 0 : index
    %19 = vector.load %arg3[%c0_11, %c0_12, %c0_13] : memref<16x72x17xf32, #tpu.memory_space<vmem>>, vector<16x16x16xf32>
    %c0_14 = arith.constant 0 : index
    %c16 = arith.constant 16 : index
    %c0_15 = arith.constant 0 : index
    %20 = vector.load %arg3[%c0_14, %c16, %c0_15] : memref<16x72x17xf32, #tpu.memory_space<vmem>>, vector<16x1x16xf32>
    %21 = vector.broadcast %18 : vector<16x16x1xf32> to vector<16x16x16xf32>
    %22 = arith.mulf %19, %21 : vector<16x16x16xf32>
    %cst_16 = arith.constant dense<0.000000e+00> : vector<16x16xf32>
    %23 = vector.multi_reduction <add>, %22, %cst_16 [1] : vector<16x16x16xf32> to vector<16x16xf32>
    %24 = vector.shape_cast %23 : vector<16x16xf32> to vector<16x1x16xf32>
    %25 = arith.addf %24, %20 : vector<16x1x16xf32>
    %26 = math.absf %25 : vector<16x1x16xf32>
    %cst_17 = arith.constant 0.000000e+00 : f32
    %27 = vector.broadcast %cst_17 : f32 to vector<16x1x16xf32>
    %28 = arith.subf %27, %26 : vector<16x1x16xf32>
    %29 = math.exp %28 : vector<16x1x16xf32>
    %cst_18 = arith.constant 0.000000e+00 : f32
    %30 = vector.broadcast %cst_18 : f32 to vector<16x1x16xf32>
    %31 = arith.cmpf oge, %25, %30 : vector<16x1x16xf32>
    %cst_19 = arith.constant 1.000000e+00 : f32
    %32 = vector.broadcast %cst_19 : f32 to vector<16x1x16xf32>
    %33 = arith.select %31, %32, %29 : vector<16x1x16xi1>, vector<16x1x16xf32>
    %cst_20 = arith.constant 1.000000e+00 : f32
    %34 = vector.broadcast %cst_20 : f32 to vector<16x1x16xf32>
    %35 = arith.addf %34, %29 : vector<16x1x16xf32>
    %36 = arith.divf %33, %35 : vector<16x1x16xf32>
    %c0_21 = arith.constant 0 : index
    %c24 = arith.constant 24 : index
    %c0_22 = arith.constant 0 : index
    %37 = vector.load %arg3[%c0_21, %c24, %c0_22] : memref<16x72x17xf32, #tpu.memory_space<vmem>>, vector<16x16x16xf32>
    %c0_23 = arith.constant 0 : index
    %c24_24 = arith.constant 24 : index
    %c16_25 = arith.constant 16 : index
    %38 = vector.load %arg3[%c0_23, %c24_24, %c16_25] : memref<16x72x17xf32, #tpu.memory_space<vmem>>, vector<16x16x1xf32>
    %39 = vector.broadcast %36 : vector<16x1x16xf32> to vector<16x16x16xf32>
    %40 = arith.mulf %37, %39 : vector<16x16x16xf32>
    %cst_26 = arith.constant dense<0.000000e+00> : vector<16x16xf32>
    %41 = vector.multi_reduction <add>, %40, %cst_26 [2] : vector<16x16x16xf32> to vector<16x16xf32>
    %42 = vector.shape_cast %41 : vector<16x16xf32> to vector<16x16x1xf32>
    %43 = arith.addf %42, %38 : vector<16x16x1xf32>
    %44 = math.absf %43 : vector<16x16x1xf32>
    %cst_27 = arith.constant 0.000000e+00 : f32
    %45 = vector.broadcast %cst_27 : f32 to vector<16x16x1xf32>
    %46 = arith.subf %45, %44 : vector<16x16x1xf32>
    %47 = math.exp %46 : vector<16x16x1xf32>
    %cst_28 = arith.constant 0.000000e+00 : f32
    %48 = vector.broadcast %cst_28 : f32 to vector<16x16x1xf32>
    %49 = arith.cmpf oge, %43, %48 : vector<16x16x1xf32>
    %cst_29 = arith.constant 1.000000e+00 : f32
    %50 = vector.broadcast %cst_29 : f32 to vector<16x16x1xf32>
    %51 = arith.select %49, %50, %47 : vector<16x16x1xi1>, vector<16x16x1xf32>
    %cst_30 = arith.constant 1.000000e+00 : f32
    %52 = vector.broadcast %cst_30 : f32 to vector<16x16x1xf32>
    %53 = arith.addf %52, %47 : vector<16x16x1xf32>
    %54 = arith.divf %51, %53 : vector<16x16x1xf32>
    %c0_31 = arith.constant 0 : index
    %c40 = arith.constant 40 : index
    %c0_32 = arith.constant 0 : index
    %55 = vector.load %arg3[%c0_31, %c40, %c0_32] : memref<16x72x17xf32, #tpu.memory_space<vmem>>, vector<16x16x8xf32>
    %c0_33 = arith.constant 0 : index
    %c56 = arith.constant 56 : index
    %c0_34 = arith.constant 0 : index
    %56 = vector.load %arg3[%c0_33, %c56, %c0_34] : memref<16x72x17xf32, #tpu.memory_space<vmem>>, vector<16x1x8xf32>
    %57 = vector.broadcast %54 : vector<16x16x1xf32> to vector<16x16x8xf32>
    %58 = arith.mulf %55, %57 : vector<16x16x8xf32>
    %cst_35 = arith.constant dense<0.000000e+00> : vector<16x8xf32>
    %59 = vector.multi_reduction <add>, %58, %cst_35 [1] : vector<16x16x8xf32> to vector<16x8xf32>
    %60 = vector.shape_cast %59 : vector<16x8xf32> to vector<16x1x8xf32>
    %61 = arith.addf %60, %56 : vector<16x1x8xf32>
    %62 = math.absf %61 : vector<16x1x8xf32>
    %cst_36 = arith.constant 0.000000e+00 : f32
    %63 = vector.broadcast %cst_36 : f32 to vector<16x1x8xf32>
    %64 = arith.subf %63, %62 : vector<16x1x8xf32>
    %65 = math.exp %64 : vector<16x1x8xf32>
    %cst_37 = arith.constant 0.000000e+00 : f32
    %66 = vector.broadcast %cst_37 : f32 to vector<16x1x8xf32>
    %67 = arith.cmpf oge, %61, %66 : vector<16x1x8xf32>
    %cst_38 = arith.constant 1.000000e+00 : f32
    %68 = vector.broadcast %cst_38 : f32 to vector<16x1x8xf32>
    %69 = arith.select %67, %68, %65 : vector<16x1x8xi1>, vector<16x1x8xf32>
    %cst_39 = arith.constant 1.000000e+00 : f32
    %70 = vector.broadcast %cst_39 : f32 to vector<16x1x8xf32>
    %71 = arith.addf %70, %65 : vector<16x1x8xf32>
    %72 = arith.divf %69, %71 : vector<16x1x8xf32>
    %c0_40 = arith.constant 0 : index
    %c64 = arith.constant 64 : index
    %c0_41 = arith.constant 0 : index
    %73 = vector.load %arg3[%c0_40, %c64, %c0_41] : memref<16x72x17xf32, #tpu.memory_space<vmem>>, vector<16x1x8xf32>
    %c0_42 = arith.constant 0 : index
    %c64_43 = arith.constant 64 : index
    %c8 = arith.constant 8 : index
    %74 = vector.load %arg3[%c0_42, %c64_43, %c8] : memref<16x72x17xf32, #tpu.memory_space<vmem>>, vector<16x1x1xf32>
    %75 = arith.mulf %73, %72 : vector<16x1x8xf32>
    %cst_44 = arith.constant dense<0.000000e+00> : vector<16x1xf32>
    %76 = vector.multi_reduction <add>, %75, %cst_44 [2] : vector<16x1x8xf32> to vector<16x1xf32>
    %77 = vector.shape_cast %76 : vector<16x1xf32> to vector<16x1x1xf32>
    %78 = arith.addf %77, %74 : vector<16x1x1xf32>
    %79 = vector.shape_cast %78 : vector<16x1x1xf32> to vector<16x1xf32>
    %c0_45 = arith.constant 0 : index
    %c0_46 = arith.constant 0 : index
    %c0_47 = arith.constant 0 : index
    %80 = vector.load %arg4[%c0_45, %c0_46, %c0_47] : memref<1x16x1xf32, #tpu.memory_space<vmem>>, vector<1x16x1xf32>
    %81 = vector.shape_cast %80 : vector<1x16x1xf32> to vector<16x1xf32>
    %82 = vector.shape_cast %79 : vector<16x1xf32> to vector<1x16x1xf32>
    tpu.vector_store %arg4[%c0_45, %c0_46, %c0_47], %82 {strides = array<i32>} : memref<1x16x1xf32, #tpu.memory_space<vmem>>, vector<1x16x1xf32>,
    return
  }
  func.func @transform_0(%arg0: i32) -> (i32, i32, i32) {
    %c0_i32 = arith.constant 0 : i32
    %c0_i32_0 = arith.constant 0 : i32
    %c0_i32_1 = arith.constant 0 : i32
    return %arg0, %c0_i32, %c0_i32_0 : i32, i32, i32
  }
  func.func @transform_1(%arg0: i32) -> (i32, i32, i32) {
    %c0_i32 = arith.constant 0 : i32
    %c0_i32_0 = arith.constant 0 : i32
    %c0_i32_1 = arith.constant 0 : i32
    return %arg0, %c0_i32, %c0_i32_0 : i32, i32, i32
  }
  func.func @transform_2(%arg0: i32) -> (i32, i32, i32) {
    %c0_i32 = arith.constant 0 : i32
    %c0_i32_0 = arith.constant 0 : i32
    %c0_i32_1 = arith.constant 0 : i32
    return %arg0, %c0_i32, %c0_i32_0 : i32, i32, i32
  }
  func.func @transform_3(%arg0: i32) -> (i32, i32, i32) {
    %c0_i32 = arith.constant 0 : i32
    %c0_i32_0 = arith.constant 0 : i32
    %c0_i32_1 = arith.constant 0 : i32
    return %arg0, %c0_i32, %c0_i32_0 : i32, i32, i32
  }
}

</mosaic_0001>

<llo_original>
// kernel: tpu_custom_call.1
$region0: #{tpu_custom_call.1}
  #allocation0 [shape = 'u32[]', space=smem, size = 0x4, offset = 0x4, fixed_abs, tag = 'smem constant byte address 0x4 - core index']
  #allocation1 [shape = 'u32[144,128]{1,0:T(1,128)}', space=vmem, size = 0x12000, scoped, tag = 'internal scratch']
  %s0 = inlined_call_operand.vmem [shape: f32[32,1,32], index: 0, kind: input, shape index: {}]
  %s1 = inlined_call_operand.vmem [shape: f32[32,16,33], index: 1, kind: input, shape index: {}]
  %s2 = inlined_call_operand.vmem [shape: f32[32,72,17], index: 2, kind: input, shape index: {}]
  %s3 = inlined_call_operand.vmem [shape: f32[2,16,1], index: 3, kind: output, shape index: {}]
  %s4 = sld [smem:[#allocation0]]
  $region45: #{tpu_custom_call.1} parent=0
    _
  %s6 = ssub.s32 1, %s4
  %s7 = scalar_select 0, %s6, %s4
  loop: start=0, step=1, limit=4
  $region2: #{tpu_custom_call.1} parent=0 // loop_pre_header
    _
  $region3: #{tpu_custom_call.1} parent=0 // loop_header
    %s9 = sphi 0, %s13
    %p10 = scmp.ge.s32.totalorder %s9, 4
    %s19 = sphi 0, %s21
    %s22 = sphi 0, %s19
    %s23 = sphi 0, %s22
    %s39 = sphi 0, %s23
    %s45 = sphi 0, %s47
    %s48 = sphi 0, %s45
    %s49 = sphi 0, %s48
    %s65 = sphi 0, %s49
    %s71 = sphi 0, %s73
    %s74 = sphi 0, %s71
    %s75 = sphi 0, %s74
    %s91 = sphi 0, %s75
    %s97 = sphi 0, %s99
    %s100 = sphi 0, %s97
    %s101 = sphi 0, %s100
    %s117 = sphi 0, %s101
  $region4: #{tpu_custom_call.1} parent=0 // loop_header_branch
    %12 = sbr.rel (%p10) target = $region8
  $region5: #{tpu_custom_call.1} parent=0 // loop_body
    %s14 = ssub.s32 %s9, 1
    %s15 = ssub.s32 %s9, 2
    %s16 = sadd.s32 %s9, 1
    %s17 = ssub.s32 %s9, %s16
    %p18 = scmp.eq.s32.totalorder %s17, 0
    %s20 = sadd.s32 %s19, 1
    %s21 = scalar_select %p18, %s19, %s20
    %p24 = pneg %p18
    %p25 = scmp.eq.s32.totalorder %s9, 1
    %p26 = por %p24, %p25
    %p27 = scmp.ne.s32.totalorder %s19, %s22
    %p28 = scmp.eq.s32.totalorder %s9, 0
    %p29 = por %p27, %p28
    %p30 = scmp.ne.s32.totalorder %s19, %s22
    %p31 = scmp.eq.s32.totalorder %s14, 1
    %p32 = por %p30, %p31
    %p33 = scmp.ne.s32.totalorder %s22, %s23
    %p34 = scmp.eq.s32.totalorder %s14, 0
    %p35 = por %p33, %p34
    %p36 = scmp.ne.s32.totalorder %s22, %s23
    %p37 = scmp.eq.s32.totalorder %s15, 1
    %p38 = por %p36, %p37
    %p40 = scmp.ne.s32.totalorder %s23, %s39
    %p41 = scmp.eq.s32.totalorder %s15, 0
    %p42 = por %p40, %p41
    %s43 = ssub.s32 %s9, %s16
    %p44 = scmp.eq.s32.totalorder %s43, 0
    %s46 = sadd.s32 %s45, 1
    %s47 = scalar_select %p44, %s45, %s46
    %p50 = pneg %p44
    %p51 = scmp.eq.s32.totalorder %s9, 1
    %p52 = por %p50, %p51
    %p53 = scmp.ne.s32.totalorder %s45, %s48
    %p54 = scmp.eq.s32.totalorder %s9, 0
    %p55 = por %p53, %p54
    %p56 = scmp.ne.s32.totalorder %s45, %s48
    %p57 = scmp.eq.s32.totalorder %s14, 1
    %p58 = por %p56, %p57
    %p59 = scmp.ne.s32.totalorder %s48, %s49
    %p60 = scmp.eq.s32.totalorder %s14, 0
    %p61 = por %p59, %p60
    %p62 = scmp.ne.s32.totalorder %s48, %s49
    %p63 = scmp.eq.s32.totalorder %s15, 1
    %p64 = por %p62, %p63
    %p66 = scmp.ne.s32.totalorder %s49, %s65
    %p67 = scmp.eq.s32.totalorder %s15, 0
    %p68 = por %p66, %p67
    %s69 = ssub.s32 %s9, %s16
    %p70 = scmp.eq.s32.totalorder %s69, 0
    %s72 = sadd.s32 %s71, 1
    %s73 = scalar_select %p70, %s71, %s72
    %p76 = pneg %p70
    %p77 = scmp.eq.s32.totalorder %s9, 1
    %p78 = por %p76, %p77
    %p79 = scmp.ne.s32.totalorder %s71, %s74
    %p80 = scmp.eq.s32.totalorder %s9, 0
    %p81 = por %p79, %p80
    %p82 = scmp.ne.s32.totalorder %s71, %s74
    %p83 = scmp.eq.s32.totalorder %s14, 1
    %p84 = por %p82, %p83
    %p85 = scmp.ne.s32.totalorder %s74, %s75
    %p86 = scmp.eq.s32.totalorder %s14, 0
    %p87 = por %p85, %p86
    %p88 = scmp.ne.s32.totalorder %s74, %s75
    %p89 = scmp.eq.s32.totalorder %s15, 1
    %p90 = por %p88, %p89
    %p92 = scmp.ne.s32.totalorder %s75, %s91
    %p93 = scmp.eq.s32.totalorder %s15, 0
    %p94 = por %p92, %p93
    %s95 = ssub.s32 %s9, %s16
    %p96 = scmp.eq.s32.totalorder %s95, 0
    %s98 = sadd.s32 %s97, 1
    %s99 = scalar_select %p96, %s97, %s98
    %p102 = pneg %p96
    %p103 = scmp.eq.s32.totalorder %s9, 1
    %p104 = por %p102, %p103
    %p105 = scmp.ne.s32.totalorder %s97, %s100
    %p106 = scmp.eq.s32.totalorder %s9, 0
    %p107 = por %p105, %p106
    %p108 = scmp.ne.s32.totalorder %s97, %s100
    %p109 = scmp.eq.s32.totalorder %s14, 1
    %p110 = por %p108, %p109
    %p111 = scmp.ne.s32.totalorder %s100, %s101
    %p112 = scmp.eq.s32.totalorder %s14, 0
    %p113 = por %p111, %p112
    %p114 = scmp.ne.s32.totalorder %s100, %s101
    %p115 = scmp.eq.s32.totalorder %s15, 1
    %p116 = por %p114, %p115
    %p118 = scmp.ne.s32.totalorder %s101, %s117
    %p119 = scmp.eq.s32.totalorder %s15, 0
    %p120 = por %p118, %p119
    %p121 = scmp.le.s32.totalorder 1, %s9
    %p122 = scmp.lt.s32.totalorder %s9, 3
    %p123 = pnand %p121, %p122
    %p124 = pneg %p123
    // Predicated region
    $region9: #{tpu_custom_call.1} parent=5 // pred_check
      _
    $region10: #{tpu_custom_call.1} parent=5 // pred_check_branch
      %126 = sbr.rel (%p123) target = $region12
    $region11: #{tpu_custom_call.1} parent=5 // pred_region
      %s127 = ssub.s32 %s9, 1
    $region12: #{tpu_custom_call.1} parent=5 // pred_fallthru
      _
    %p128 = scmp.lt.s32.totalorder %s9, 2
    // Predicated region
    $region13: #{tpu_custom_call.1} parent=5 // pred_check
      %p129 = pneg %p128
    $region14: #{tpu_custom_call.1} parent=5 // pred_check_branch
      %131 = sbr.rel (%p129) target = $region16
    $region15: #{tpu_custom_call.1} parent=5 // pred_region
      // Predicated region
      $region17: #{tpu_custom_call.1} parent=15 // pred_check
        %p132 = pneg %p29
      $region18: #{tpu_custom_call.1} parent=15 // pred_check_branch
        %134 = sbr.rel (%p132) target = $region20
      $region19: #{tpu_custom_call.1} parent=15 // pred_region
        %s135 = smul.u32 16, %s9
        %p136 = scmp.lt.s32.totalorder %s135, 31
        %s137 = scalar_select %p136, %s135, 31
        %s138 = scalar_lea.vmem %s0, %s137
        %s139 = smul.u32 16, %s9
      $region20: #{tpu_custom_call.1} parent=15 // pred_fallthru
        _
      // Predicated region
      $region21: #{tpu_custom_call.1} parent=15 // pred_check
        %p140 = pneg %p55
      $region22: #{tpu_custom_call.1} parent=15 // pred_check_branch
        %142 = sbr.rel (%p140) target = $region24
      $region23: #{tpu_custom_call.1} parent=15 // pred_region
        %s143 = smul.u32 16, %s9
        %p144 = scmp.lt.s32.totalorder %s143, 31
        %s145 = scalar_select %p144, %s143, 31
        %s146 = smul.addr %s145, 2
        %s147 = smul.addr %s146, 8
        %s148 = scalar_lea.vmem %s1, %s147
        %s149 = smul.u32 16, %s9
      $region24: #{tpu_custom_call.1} parent=15 // pred_fallthru
        _
      // Predicated region
      $region25: #{tpu_custom_call.1} parent=15 // pred_check
        %p150 = pneg %p81
      $region26: #{tpu_custom_call.1} parent=15 // pred_check_branch
        %152 = sbr.rel (%p150) target = $region28
      $region27: #{tpu_custom_call.1} parent=15 // pred_region
        %s153 = smul.u32 16, %s9
        %p154 = scmp.lt.s32.totalorder %s153, 31
        %s155 = scalar_select %p154, %s153, 31
        %s156 = smul.addr %s155, 9
        %s157 = smul.addr %s156, 8
        %s158 = scalar_lea.vmem %s2, %s157
        %s159 = smul.u32 16, %s9
      $region28: #{tpu_custom_call.1} parent=15 // pred_fallthru
        _
    $region16: #{tpu_custom_call.1} parent=5 // pred_fallthru
      _
    %p160 = scmp.le.s32.totalorder 1, %s9
    %p161 = scmp.lt.s32.totalorder %s9, 3
    %p162 = pnand %p160, %p161
    %p163 = pneg %p162
    // Predicated region
    $region29: #{tpu_custom_call.1} parent=5 // pred_check
      _
    $region30: #{tpu_custom_call.1} parent=5 // pred_check_branch
      %165 = sbr.rel (%p162) target = $region32
    $region31: #{tpu_custom_call.1} parent=5 // pred_region
      %s166 = ssub.s32 %s9, 1
      %s167 = smul.u32 16, %s14
      %p168 = scmp.lt.s32.totalorder %s167, 31
      %s169 = scalar_select %p168, %s167, 31
      %s170 = scalar_lea.vmem %s0, %s169
      %p171 = pneg %p35
      %p172 = pneg %p32
      %s173 = smul.u32 16, %s14
      %p174 = scmp.lt.s32.totalorder %s173, 31
      %s175 = scalar_select %p174, %s173, 31
      %s176 = smul.addr %s175, 2
      %s177 = smul.addr %s176, 8
      %s178 = scalar_lea.vmem %s1, %s177
      %p179 = pneg %p61
      %p180 = pneg %p58
      %s181 = smul.u32 16, %s14
      %p182 = scmp.lt.s32.totalorder %s181, 31
      %s183 = scalar_select %p182, %s181, 31
      %s184 = smul.addr %s183, 9
      %s185 = smul.addr %s184, 8
      %s186 = scalar_lea.vmem %s2, %s185
      %p187 = pneg %p87
      %p188 = pneg %p84
      %p189 = pneg %p113
      %p190 = pneg %p110
      %p191 = scmp.lt.s32.totalorder %s14, 1
      %s192 = scalar_select %p191, %s14, 1
      %s193 = smul.addr %s192, 2
      %s194 = smul.addr %s193, 8
      %s195 = scalar_lea.vmem %s3, %s194
      %s196 = smul.u32 16, %s14
      %p197 = scmp.lt.s32.totalorder %s196, 31
      %s198 = scalar_select %p197, %s196, 31
      %s199 = scalar_lea.vmem %s0, %s198
      %s200 = smul.u32 16, %s14
      %s201 = smul.u32 16, %s14
      %p202 = scmp.lt.s32.totalorder %s201, 31
      %s203 = scalar_select %p202, %s201, 31
      %s204 = smul.addr %s203, 2
      %s205 = smul.addr %s204, 8
      %s206 = scalar_lea.vmem %s1, %s205
      %s207 = smul.u32 16, %s14
      %s208 = smul.u32 16, %s14
      %p209 = scmp.lt.s32.totalorder %s208, 31
      %s210 = scalar_select %p209, %s208, 31
      %s211 = smul.addr %s210, 9
      %s212 = smul.addr %s211, 8
      %s213 = scalar_lea.vmem %s2, %s212
      %s214 = smul.u32 16, %s14
      %p215 = scmp.lt.s32.totalorder %s14, 1
      %s216 = scalar_select %p215, %s14, 1
      %s217 = smul.addr %s216, 2
      %s218 = smul.addr %s217, 8
      %s219 = scalar_lea.vmem %s3, %s218
      %v220 = vld [vmem:[%s199] sm:$0x1]
      %v221 = vld [vmem:[%s199 + $0x1] sm:$0x1]
      %v222 = vld [vmem:[%s199 + $0x2] sm:$0x1]
      %v223 = vld [vmem:[%s199 + $0x3] sm:$0x1]
      %v224 = vld [vmem:[%s199 + $0x4] sm:$0x1]
      %v225 = vld [vmem:[%s199 + $0x5] sm:$0x1]
      %v226 = vld [vmem:[%s199 + $0x6] sm:$0x1]
      %v227 = vld [vmem:[%s199 + $0x7] sm:$0x1]
      %v228 = vld [vmem:[%s199 + $0x8] sm:$0x1]
      %v229 = vld [vmem:[%s199 + $0x9] sm:$0x1]
      %v230 = vld [vmem:[%s199 + $0xa] sm:$0x1]
      %v231 = vld [vmem:[%s199 + $0xb] sm:$0x1]
      %v232 = vld [vmem:[%s199 + $0xc] sm:$0x1]
      %v233 = vld [vmem:[%s199 + $0xd] sm:$0x1]
      %v234 = vld [vmem:[%s199 + $0xe] sm:$0x1]
      %v235 = vld [vmem:[%s199 + $0xf] sm:$0x1]
      %v236 = vld [vmem:[%s206] sm:$0xff]
      %v237 = vld [vmem:[%s206 + $0x8] sm:$0xff]
      %v238 = vld [vmem:[%s206 + $0x10] sm:$0xff]
      %v239 = vld [vmem:[%s206 + $0x18] sm:$0xff]
      %v240 = vld [vmem:[%s206 + $0x20] sm:$0xff]
      %v241 = vld [vmem:[%s206 + $0x28] sm:$0xff]
      %v242 = vld [vmem:[%s206 + $0x30] sm:$0xff]
      %v243 = vld [vmem:[%s206 + $0x38] sm:$0xff]
      %v244 = vld [vmem:[%s206 + $0x40] sm:$0xff]
      %v245 = vld [vmem:[%s206 + $0x48] sm:$0xff]
      %v246 = vld [vmem:[%s206 + $0x50] sm:$0xff]
      %v247 = vld [vmem:[%s206 + $0x58] sm:$0xff]
      %v248 = vld [vmem:[%s206 + $0x60] sm:$0xff]
      %v249 = vld [vmem:[%s206 + $0x68] sm:$0xff]
      %v250 = vld [vmem:[%s206 + $0x70] sm:$0xff]
      %v251 = vld [vmem:[%s206 + $0x78] sm:$0xff]
      %v252 = vld [vmem:[%s206 + $0x80] sm:$0xff]
      %v253 = vld [vmem:[%s206 + $0x88] sm:$0xff]
      %v254 = vld [vmem:[%s206 + $0x90] sm:$0xff]
      %v255 = vld [vmem:[%s206 + $0x98] sm:$0xff]
      %v256 = vld [vmem:[%s206 + $0xa0] sm:$0xff]
      %v257 = vld [vmem:[%s206 + $0xa8] sm:$0xff]
      %v258 = vld [vmem:[%s206 + $0xb0] sm:$0xff]
      %v259 = vld [vmem:[%s206 + $0xb8] sm:$0xff]
      %v260 = vld [vmem:[%s206 + $0xc0] sm:$0xff]
      %v261 = vld [vmem:[%s206 + $0xc8] sm:$0xff]
      %v262 = vld [vmem:[%s206 + $0xd0] sm:$0xff]
      %v263 = vld [vmem:[%s206 + $0xd8] sm:$0xff]
      %v264 = vld [vmem:[%s206 + $0xe0] sm:$0xff]
      %v265 = vld [vmem:[%s206 + $0xe8] sm:$0xff]
      %v266 = vld [vmem:[%s206 + $0xf0] sm:$0xff]
      %v267 = vld [vmem:[%s206 + $0xf8] sm:$0xff]
      %v284 = vlaneseq
      %v285 = vshrl.u32 %v284, 7
      %v286 = vsub.s32 0, %v285
      %v287 = vrot.slane %v220, %v286
      %v288 = vlaneseq
      %v289 = vshrl.u32 %v288, 7
      %v290 = vsub.s32 0, %v289
      %v291 = vrot.slane %v221, %v290
      %v292 = vlaneseq
      %v293 = vshrl.u32 %v292, 7
      %v294 = vsub.s32 0, %v293
      %v295 = vrot.slane %v222, %v294
      %v296 = vlaneseq
      %v297 = vshrl.u32 %v296, 7
      %v298 = vsub.s32 0, %v297
      %v299 = vrot.slane %v223, %v298
      %v300 = vlaneseq
      %v301 = vshrl.u32 %v300, 7
      %v302 = vsub.s32 0, %v301
      %v303 = vrot.slane %v224, %v302
      %v304 = vlaneseq
      %v305 = vshrl.u32 %v304, 7
      %v306 = vsub.s32 0, %v305
      %v307 = vrot.slane %v225, %v306
      %v308 = vlaneseq
      %v309 = vshrl.u32 %v308, 7
      %v310 = vsub.s32 0, %v309
      %v311 = vrot.slane %v226, %v310
      %v312 = vlaneseq
      %v313 = vshrl.u32 %v312, 7
      %v314 = vsub.s32 0, %v313
      %v315 = vrot.slane %v227, %v314
      %v316 = vlaneseq
      %v317 = vshrl.u32 %v316, 7
      %v318 = vsub.s32 0, %v317
      %v319 = vrot.slane %v228, %v318
      %v320 = vlaneseq
      %v321 = vshrl.u32 %v320, 7
      %v322 = vsub.s32 0, %v321
      %v323 = vrot.slane %v229, %v322
      %v324 = vlaneseq
      %v325 = vshrl.u32 %v324, 7
      %v326 = vsub.s32 0, %v325
      %v327 = vrot.slane %v230, %v326
      %v328 = vlaneseq
      %v329 = vshrl.u32 %v328, 7
      %v330 = vsub.s32 0, %v329
      %v331 = vrot.slane %v231, %v330
      %v332 = vlaneseq
      %v333 = vshrl.u32 %v332, 7
      %v334 = vsub.s32 0, %v333
      %v335 = vrot.slane %v232, %v334
      %v336 = vlaneseq
      %v337 = vshrl.u32 %v336, 7
      %v338 = vsub.s32 0, %v337
      %v339 = vrot.slane %v233, %v338
      %v340 = vlaneseq
      %v341 = vshrl.u32 %v340, 7
      %v342 = vsub.s32 0, %v341
      %v343 = vrot.slane %v234, %v342
      %v344 = vlaneseq
      %v345 = vshrl.u32 %v344, 7
      %v346 = vsub.s32 0, %v345
      %v347 = vrot.slane %v235, %v346
      %v364 = vmul.f32 %v236, %v287
      %v365 = vmul.f32 %v237, %v287
      %v366 = vmul.f32 %v238, %v291
      %v367 = vmul.f32 %v239, %v291
      %v368 = vmul.f32 %v240, %v295
      %v369 = vmul.f32 %v241, %v295
      %v370 = vmul.f32 %v242, %v299
      %v371 = vmul.f32 %v243, %v299
      %v372 = vmul.f32 %v244, %v303
      %v373 = vmul.f32 %v245, %v303
      %v374 = vmul.f32 %v246, %v307
      %v375 = vmul.f32 %v247, %v307
      %v376 = vmul.f32 %v248, %v311
      %v377 = vmul.f32 %v249, %v311
      %v378 = vmul.f32 %v250, %v315
      %v379 = vmul.f32 %v251, %v315
      %v380 = vmul.f32 %v252, %v319
      %v381 = vmul.f32 %v253, %v319
      %v382 = vmul.f32 %v254, %v323
      %v383 = vmul.f32 %v255, %v323
      %v384 = vmul.f32 %v256, %v327
      %v385 = vmul.f32 %v257, %v327
      %v386 = vmul.f32 %v258, %v331
      %v387 = vmul.f32 %v259, %v331
      %v388 = vmul.f32 %v260, %v335
      %v389 = vmul.f32 %v261, %v335
      %v390 = vmul.f32 %v262, %v339
      %v391 = vmul.f32 %v263, %v339
      %v392 = vmul.f32 %v264, %v343
      %v393 = vmul.f32 %v265, %v343
      %v394 = vmul.f32 %v266, %v347
      %v395 = vmul.f32 %v267, %v347
      %vm396 = vcmask 261120
      %v397 = vsel %vm396, %v364, 0.0
      %398 = vadd.xlane.f32.xlu0 %v397
      %v399 = vpop.xlane.xlu0 %398
      %v400 = vsel %vm396, %v365, 0.0
      %401 = vadd.xlane.f32.xlu0 %v400
      %v402 = vpop.xlane.xlu0 %401
      %v403 = vsel %vm396, %v366, 0.0
      %404 = vadd.xlane.f32.xlu0 %v403
      %v405 = vpop.xlane.xlu0 %404
      %v406 = vsel %vm396, %v367, 0.0
      %407 = vadd.xlane.f32.xlu0 %v406
      %v408 = vpop.xlane.xlu0 %407
      %v409 = vsel %vm396, %v368, 0.0
      %410 = vadd.xlane.f32.xlu0 %v409
      %v411 = vpop.xlane.xlu0 %410
      %v412 = vsel %vm396, %v369, 0.0
      %413 = vadd.xlane.f32.xlu0 %v412
      %v414 = vpop.xlane.xlu0 %413
      %v415 = vsel %vm396, %v370, 0.0
      %416 = vadd.xlane.f32.xlu0 %v415
      %v417 = vpop.xlane.xlu0 %416
      %v418 = vsel %vm396, %v371, 0.0
      %419 = vadd.xlane.f32.xlu0 %v418
      %v420 = vpop.xlane.xlu0 %419
      %v421 = vsel %vm396, %v372, 0.0
      %422 = vadd.xlane.f32.xlu0 %v421
      %v423 = vpop.xlane.xlu0 %422
      %v424 = vsel %vm396, %v373, 0.0
      %425 = vadd.xlane.f32.xlu0 %v424
      %v426 = vpop.xlane.xlu0 %425
      %v427 = vsel %vm396, %v374, 0.0
      %428 = vadd.xlane.f32.xlu0 %v427
      %v429 = vpop.xlane.xlu0 %428
      %v430 = vsel %vm396, %v375, 0.0
      %431 = vadd.xlane.f32.xlu0 %v430
      %v432 = vpop.xlane.xlu0 %431
      %v433 = vsel %vm396, %v376, 0.0
      %434 = vadd.xlane.f32.xlu0 %v433
      %v435 = vpop.xlane.xlu0 %434
      %v436 = vsel %vm396, %v377, 0.0
      %437 = vadd.xlane.f32.xlu0 %v436
      %v438 = vpop.xlane.xlu0 %437
      %v439 = vsel %vm396, %v378, 0.0
      %440 = vadd.xlane.f32.xlu0 %v439
      %v441 = vpop.xlane.xlu0 %440
      %v442 = vsel %vm396, %v379, 0.0
      %443 = vadd.xlane.f32.xlu0 %v442
      %v444 = vpop.xlane.xlu0 %443
      %v445 = vsel %vm396, %v380, 0.0
      %446 = vadd.xlane.f32.xlu0 %v445
      %v447 = vpop.xlane.xlu0 %446
      %v448 = vsel %vm396, %v381, 0.0
      %449 = vadd.xlane.f32.xlu0 %v448
      %v450 = vpop.xlane.xlu0 %449
      %v451 = vsel %vm396, %v382, 0.0
      %452 = vadd.xlane.f32.xlu0 %v451
      %v453 = vpop.xlane.xlu0 %452
      %v454 = vsel %vm396, %v383, 0.0
      %455 = vadd.xlane.f32.xlu0 %v454
      %v456 = vpop.xlane.xlu0 %455
      %v457 = vsel %vm396, %v384, 0.0
      %458 = vadd.xlane.f32.xlu0 %v457
      %v459 = vpop.xlane.xlu0 %458
      %v460 = vsel %vm396, %v385, 0.0
      %461 = vadd.xlane.f32.xlu0 %v460
      %v462 = vpop.xlane.xlu0 %461
      %v463 = vsel %vm396, %v386, 0.0
      %464 = vadd.xlane.f32.xlu0 %v463
      %v465 = vpop.xlane.xlu0 %464
      %v466 = vsel %vm396, %v387, 0.0
      %467 = vadd.xlane.f32.xlu0 %v466
      %v468 = vpop.xlane.xlu0 %467
      %v469 = vsel %vm396, %v388, 0.0
      %470 = vadd.xlane.f32.xlu0 %v469
      %v471 = vpop.xlane.xlu0 %470
      %v472 = vsel %vm396, %v389, 0.0
      %473 = vadd.xlane.f32.xlu0 %v472
      %v474 = vpop.xlane.xlu0 %473
      %v475 = vsel %vm396, %v390, 0.0
      %476 = vadd.xlane.f32.xlu0 %v475
      %v477 = vpop.xlane.xlu0 %476
      %v478 = vsel %vm396, %v391, 0.0
      %479 = vadd.xlane.f32.xlu0 %v478
      %v480 = vpop.xlane.xlu0 %479
      %v481 = vsel %vm396, %v392, 0.0
      %482 = vadd.xlane.f32.xlu0 %v481
      %v483 = vpop.xlane.xlu0 %482
      %v484 = vsel %vm396, %v393, 0.0
      %485 = vadd.xlane.f32.xlu0 %v484
      %v486 = vpop.xlane.xlu0 %485
      %v487 = vsel %vm396, %v394, 0.0
      %488 = vadd.xlane.f32.xlu0 %v487
      %v489 = vpop.xlane.xlu0 %488
      %v490 = vsel %vm396, %v395, 0.0
      %491 = vadd.xlane.f32.xlu0 %v490
      %v492 = vpop.xlane.xlu0 %491
      %v493 = vadd.f32 %v399, %v236
      %v494 = vadd.f32 %v402, %v237
      %v495 = vadd.f32 %v405, %v238
      %v496 = vadd.f32 %v408, %v239
      %v497 = vadd.f32 %v411, %v240
      %v498 = vadd.f32 %v414, %v241
      %v499 = vadd.f32 %v417, %v242
      %v500 = vadd.f32 %v420, %v243
      %v501 = vadd.f32 %v423, %v244
      %v502 = vadd.f32 %v426, %v245
      %v503 = vadd.f32 %v429, %v246
      %v504 = vadd.f32 %v432, %v247
      %v505 = vadd.f32 %v435, %v248
      %v506 = vadd.f32 %v438, %v249
      %v507 = vadd.f32 %v441, %v250
      %v508 = vadd.f32 %v444, %v251
      %v509 = vadd.f32 %v447, %v252
      %v510 = vadd.f32 %v450, %v253
      %v511 = vadd.f32 %v453, %v254
      %v512 = vadd.f32 %v456, %v255
      %v513 = vadd.f32 %v459, %v256
      %v514 = vadd.f32 %v462, %v257
      %v515 = vadd.f32 %v465, %v258
      %v516 = vadd.f32 %v468, %v259
      %v517 = vadd.f32 %v471, %v260
      %v518 = vadd.f32 %v474, %v261
      %v519 = vadd.f32 %v477, %v262
      %v520 = vadd.f32 %v480, %v263
      %v521 = vadd.f32 %v483, %v264
      %v522 = vadd.f32 %v486, %v265
      %v523 = vadd.f32 %v489, %v266
      %v524 = vadd.f32 %v492, %v267
      %v525 = vand.u32 2147483647, %v493
      %v526 = vand.u32 2147483647, %v494
      %v527 = vand.u32 2147483647, %v495
      %v528 = vand.u32 2147483647, %v496
      %v529 = vand.u32 2147483647, %v497
      %v530 = vand.u32 2147483647, %v498
      %v531 = vand.u32 2147483647, %v499
      %v532 = vand.u32 2147483647, %v500
      %v533 = vand.u32 2147483647, %v501
      %v534 = vand.u32 2147483647, %v502
      %v535 = vand.u32 2147483647, %v503
      %v536 = vand.u32 2147483647, %v504
      %v537 = vand.u32 2147483647, %v505
      %v538 = vand.u32 2147483647, %v506
      %v539 = vand.u32 2147483647, %v507
      %v540 = vand.u32 2147483647, %v508
      %v541 = vand.u32 2147483647, %v509
      %v542 = vand.u32 2147483647, %v510
      %v543 = vand.u32 2147483647, %v511
      %v544 = vand.u32 2147483647, %v512
      %v545 = vand.u32 2147483647, %v513
      %v546 = vand.u32 2147483647, %v514
      %v547 = vand.u32 2147483647, %v515
      %v548 = vand.u32 2147483647, %v516
      %v549 = vand.u32 2147483647, %v517
      %v550 = vand.u32 2147483647, %v518
      %v551 = vand.u32 2147483647, %v519
      %v552 = vand.u32 2147483647, %v520
      %v553 = vand.u32 2147483647, %v521
      %v554 = vand.u32 2147483647, %v522
      %v555 = vand.u32 2147483647, %v523
      %v556 = vand.u32 2147483647, %v524
      %v557 = vsub.f32 0.0, %v525
      %v558 = vsub.f32 0.0, %v526
      %v559 = vsub.f32 0.0, %v527
      %v560 = vsub.f32 0.0, %v528
      %v561 = vsub.f32 0.0, %v529
      %v562 = vsub.f32 0.0, %v530
      %v563 = vsub.f32 0.0, %v531
      %v564 = vsub.f32 0.0, %v532
      %v565 = vsub.f32 0.0, %v533
      %v566 = vsub.f32 0.0, %v534
      %v567 = vsub.f32 0.0, %v535
      %v568 = vsub.f32 0.0, %v536
      %v569 = vsub.f32 0.0, %v537
      %v570 = vsub.f32 0.0, %v538
      %v571 = vsub.f32 0.0, %v539
      %v572 = vsub.f32 0.0, %v540
      %v573 = vsub.f32 0.0, %v541
      %v574 = vsub.f32 0.0, %v542
      %v575 = vsub.f32 0.0, %v543
      %v576 = vsub.f32 0.0, %v544
      %v577 = vsub.f32 0.0, %v545
      %v578 = vsub.f32 0.0, %v546
      %v579 = vsub.f32 0.0, %v547
      %v580 = vsub.f32 0.0, %v548
      %v581 = vsub.f32 0.0, %v549
      %v582 = vsub.f32 0.0, %v550
      %v583 = vsub.f32 0.0, %v551
      %v584 = vsub.f32 0.0, %v552
      %v585 = vsub.f32 0.0, %v553
      %v586 = vsub.f32 0.0, %v554
      %v587 = vsub.f32 0.0, %v555
      %v588 = vsub.f32 0.0, %v556
      %v589 = vmul.f32 %v557, 1.442695
      %v590 = vpow.pop %v589
      %v591 = vmul.f32 %v558, 1.442695
      %v592 = vpow.pop %v591
      %v593 = vmul.f32 %v559, 1.442695
      %v594 = vpow.pop %v593
      %v595 = vmul.f32 %v560, 1.442695
      %v596 = vpow.pop %v595
      %v597 = vmul.f32 %v561, 1.442695
      %v598 = vpow.pop %v597
      %v599 = vmul.f32 %v562, 1.442695
      %v600 = vpow.pop %v599
      %v601 = vmul.f32 %v563, 1.442695
      %v602 = vpow.pop %v601
      %v603 = vmul.f32 %v564, 1.442695
      %v604 = vpow.pop %v603
      %v605 = vmul.f32 %v565, 1.442695
      %v606 = vpow.pop %v605
      %v607 = vmul.f32 %v566, 1.442695
      %v608 = vpow.pop %v607
      %v609 = vmul.f32 %v567, 1.442695
      %v610 = vpow.pop %v609
      %v611 = vmul.f32 %v568, 1.442695
      %v612 = vpow.pop %v611
      %v613 = vmul.f32 %v569, 1.442695
      %v614 = vpow.pop %v613
      %v615 = vmul.f32 %v570, 1.442695
      %v616 = vpow.pop %v615
      %v617 = vmul.f32 %v571, 1.442695
      %v618 = vpow.pop %v617
      %v619 = vmul.f32 %v572, 1.442695
      %v620 = vpow.pop %v619
      %v621 = vmul.f32 %v573, 1.442695
      %v622 = vpow.pop %v621
      %v623 = vmul.f32 %v574, 1.442695
      %v624 = vpow.pop %v623
      %v625 = vmul.f32 %v575, 1.442695
      %v626 = vpow.pop %v625
      %v627 = vmul.f32 %v576, 1.442695
      %v628 = vpow.pop %v627
      %v629 = vmul.f32 %v577, 1.442695
      %v630 = vpow.pop %v629
      %v631 = vmul.f32 %v578, 1.442695
      %v632 = vpow.pop %v631
      %v633 = vmul.f32 %v579, 1.442695
      %v634 = vpow.pop %v633
      %v635 = vmul.f32 %v580, 1.442695
      %v636 = vpow.pop %v635
      %v637 = vmul.f32 %v581, 1.442695
      %v638 = vpow.pop %v637
      %v639 = vmul.f32 %v582, 1.442695
      %v640 = vpow.pop %v639
      %v641 = vmul.f32 %v583, 1.442695
      %v642 = vpow.pop %v641
      %v643 = vmul.f32 %v584, 1.442695
      %v644 = vpow.pop %v643
      %v645 = vmul.f32 %v585, 1.442695
      %v646 = vpow.pop %v645
      %v647 = vmul.f32 %v586, 1.442695
      %v648 = vpow.pop %v647
      %v649 = vmul.f32 %v587, 1.442695
      %v650 = vpow.pop %v649
      %v651 = vmul.f32 %v588, 1.442695
      %v652 = vpow.pop %v651
      %vm653 = vcmp.ge.f32.partialorder %v493, 0.0
      %vm654 = vcmp.ge.f32.partialorder %v494, 0.0
      %vm655 = vcmp.ge.f32.partialorder %v495, 0.0
      %vm656 = vcmp.ge.f32.partialorder %v496, 0.0
      %vm657 = vcmp.ge.f32.partialorder %v497, 0.0
      %vm658 = vcmp.ge.f32.partialorder %v498, 0.0
      %vm659 = vcmp.ge.f32.partialorder %v499, 0.0
      %vm660 = vcmp.ge.f32.partialorder %v500, 0.0
      %vm661 = vcmp.ge.f32.partialorder %v501, 0.0
      %vm662 = vcmp.ge.f32.partialorder %v502, 0.0
      %vm663 = vcmp.ge.f32.partialorder %v503, 0.0
      %vm664 = vcmp.ge.f32.partialorder %v504, 0.0
      %vm665 = vcmp.ge.f32.partialorder %v505, 0.0
      %vm666 = vcmp.ge.f32.partialorder %v506, 0.0
      %vm667 = vcmp.ge.f32.partialorder %v507, 0.0
      %vm668 = vcmp.ge.f32.partialorder %v508, 0.0
      %vm669 = vcmp.ge.f32.partialorder %v509, 0.0
      %vm670 = vcmp.ge.f32.partialorder %v510, 0.0
      %vm671 = vcmp.ge.f32.partialorder %v511, 0.0
      %vm672 = vcmp.ge.f32.partialorder %v512, 0.0
      %vm673 = vcmp.ge.f32.partialorder %v513, 0.0
      %vm674 = vcmp.ge.f32.partialorder %v514, 0.0
      %vm675 = vcmp.ge.f32.partialorder %v515, 0.0
      %vm676 = vcmp.ge.f32.partialorder %v516, 0.0
      %vm677 = vcmp.ge.f32.partialorder %v517, 0.0
      %vm678 = vcmp.ge.f32.partialorder %v518, 0.0
      %vm679 = vcmp.ge.f32.partialorder %v519, 0.0
      %vm680 = vcmp.ge.f32.partialorder %v520, 0.0
      %vm681 = vcmp.ge.f32.partialorder %v521, 0.0
      %vm682 = vcmp.ge.f32.partialorder %v522, 0.0
      %vm683 = vcmp.ge.f32.partialorder %v523, 0.0
      %vm684 = vcmp.ge.f32.partialorder %v524, 0.0
      %v685 = vsel %vm653, 1.0, %v590
      %v686 = vsel %vm654, 1.0, %v592
      %v687 = vsel %vm655, 1.0, %v594
      %v688 = vsel %vm656, 1.0, %v596
      %v689 = vsel %vm657, 1.0, %v598
      %v690 = vsel %vm658, 1.0, %v600
      %v691 = vsel %vm659, 1.0, %v602
      %v692 = vsel %vm660, 1.0, %v604
      %v693 = vsel %vm661, 1.0, %v606
      %v694 = vsel %vm662, 1.0, %v608
      %v695 = vsel %vm663, 1.0, %v610
      %v696 = vsel %vm664, 1.0, %v612
      %v697 = vsel %vm665, 1.0, %v614
      %v698 = vsel %vm666, 1.0, %v616
      %v699 = vsel %vm667, 1.0, %v618
      %v700 = vsel %vm668, 1.0, %v620
      %v701 = vsel %vm669, 1.0, %v622
      %v702 = vsel %vm670, 1.0, %v624
      %v703 = vsel %vm671, 1.0, %v626
      %v704 = vsel %vm672, 1.0, %v628
      %v705 = vsel %vm673, 1.0, %v630
      %v706 = vsel %vm674, 1.0, %v632
      %v707 = vsel %vm675, 1.0, %v634
      %v708 = vsel %vm676, 1.0, %v636
      %v709 = vsel %vm677, 1.0, %v638
      %v710 = vsel %vm678, 1.0, %v640
      %v711 = vsel %vm679, 1.0, %v642
      %v712 = vsel %vm680, 1.0, %v644
      %v713 = vsel %vm681, 1.0, %v646
      %v714 = vsel %vm682, 1.0, %v648
      %v715 = vsel %vm683, 1.0, %v650
      %v716 = vsel %vm684, 1.0, %v652
      %v717 = vadd.f32 %v590, 1.0
      %v718 = vadd.f32 %v592, 1.0
      %v719 = vadd.f32 %v594, 1.0
      %v720 = vadd.f32 %v596, 1.0
      %v721 = vadd.f32 %v598, 1.0
      %v722 = vadd.f32 %v600, 1.0
      %v723 = vadd.f32 %v602, 1.0
      %v724 = vadd.f32 %v604, 1.0
      %v725 = vadd.f32 %v606, 1.0
      %v726 = vadd.f32 %v608, 1.0
      %v727 = vadd.f32 %v610, 1.0
      %v728 = vadd.f32 %v612, 1.0
      %v729 = vadd.f32 %v614, 1.0
      %v730 = vadd.f32 %v616, 1.0
      %v731 = vadd.f32 %v618, 1.0
      %v732 = vadd.f32 %v620, 1.0
      %v733 = vadd.f32 %v622, 1.0
      %v734 = vadd.f32 %v624, 1.0
      %v735 = vadd.f32 %v626, 1.0
      %v736 = vadd.f32 %v628, 1.0
      %v737 = vadd.f32 %v630, 1.0
      %v738 = vadd.f32 %v632, 1.0
      %v739 = vadd.f32 %v634, 1.0
      %v740 = vadd.f32 %v636, 1.0
      %v741 = vadd.f32 %v638, 1.0
      %v742 = vadd.f32 %v640, 1.0
      %v743 = vadd.f32 %v642, 1.0
      %v744 = vadd.f32 %v644, 1.0
      %v745 = vadd.f32 %v646, 1.0
      %v746 = vadd.f32 %v648, 1.0
      %v747 = vadd.f32 %v650, 1.0
      %v748 = vadd.f32 %v652, 1.0
      %v749 = vrcp.pop %v717
      %v750 = vmul.f32 %v685, %v749
      %v751 = vrcp.pop %v718
      %v752 = vmul.f32 %v686, %v751
      %v753 = vrcp.pop %v719
      %v754 = vmul.f32 %v687, %v753
      %v755 = vrcp.pop %v720
      %v756 = vmul.f32 %v688, %v755
      %v757 = vrcp.pop %v721
      %v758 = vmul.f32 %v689, %v757
      %v759 = vrcp.pop %v722
      %v760 = vmul.f32 %v690, %v759
      %v761 = vrcp.pop %v723
      %v762 = vmul.f32 %v691, %v761
      %v763 = vrcp.pop %v724
      %v764 = vmul.f32 %v692, %v763
      %v765 = vrcp.pop %v725
      %v766 = vmul.f32 %v693, %v765
      %v767 = vrcp.pop %v726
      %v768 = vmul.f32 %v694, %v767
      %v769 = vrcp.pop %v727
      %v770 = vmul.f32 %v695, %v769
      %v771 = vrcp.pop %v728
      %v772 = vmul.f32 %v696, %v771
      %v773 = vrcp.pop %v729
      %v774 = vmul.f32 %v697, %v773
      %v775 = vrcp.pop %v730
      %v776 = vmul.f32 %v698, %v775
      %v777 = vrcp.pop %v731
      %v778 = vmul.f32 %v699, %v777
      %v779 = vrcp.pop %v732
      %v780 = vmul.f32 %v700, %v779
      %v781 = vrcp.pop %v733
      %v782 = vmul.f32 %v701, %v781
      %v783 = vrcp.pop %v734
      %v784 = vmul.f32 %v702, %v783
      %v785 = vrcp.pop %v735
      %v786 = vmul.f32 %v703, %v785
      %v787 = vrcp.pop %v736
      %v788 = vmul.f32 %v704, %v787
      %v789 = vrcp.pop %v737
      %v790 = vmul.f32 %v705, %v789
      %v791 = vrcp.pop %v738
      %v792 = vmul.f32 %v706, %v791
      %v793 = vrcp.pop %v739
      %v794 = vmul.f32 %v707, %v793
      %v795 = vrcp.pop %v740
      %v796 = vmul.f32 %v708, %v795
      %v797 = vrcp.pop %v741
      %v798 = vmul.f32 %v709, %v797
      %v799 = vrcp.pop %v742
      %v800 = vmul.f32 %v710, %v799
      %v801 = vrcp.pop %v743
      %v802 = vmul.f32 %v711, %v801
      %v803 = vrcp.pop %v744
      %v804 = vmul.f32 %v712, %v803
      %v805 = vrcp.pop %v745
      %v806 = vmul.f32 %v713, %v805
      %v807 = vrcp.pop %v746
      %v808 = vmul.f32 %v714, %v807
      %v809 = vrcp.pop %v747
      %v810 = vmul.f32 %v715, %v809
      %v811 = vrcp.pop %v748
      %v812 = vmul.f32 %v716, %v811
      %v813 = vld [vmem:[%s213] sm:$0xff]
      %v814 = vld [vmem:[%s213 + $0x8] sm:$0xff]
      %v815 = vld [vmem:[%s213 + $0x48] sm:$0xff]
      %v816 = vld [vmem:[%s213 + $0x50] sm:$0xff]
      %v817 = vld [vmem:[%s213 + $0x90] sm:$0xff]
      %v818 = vld [vmem:[%s213 + $0x98] sm:$0xff]
      %v819 = vld [vmem:[%s213 + $0xd8] sm:$0xff]
      %v820 = vld [vmem:[%s213 + $0xe0] sm:$0xff]
      %v821 = vld [vmem:[%s213 + $0x120] sm:$0xff]
      %v822 = vld [vmem:[%s213 + $0x128] sm:$0xff]
      %v823 = vld [vmem:[%s213 + $0x168] sm:$0xff]
      %v824 = vld [vmem:[%s213 + $0x170] sm:$0xff]
      %v825 = vld [vmem:[%s213 + $0x1b0] sm:$0xff]
      %v826 = vld [vmem:[%s213 + $0x1b8] sm:$0xff]
      %v827 = vld [vmem:[%s213 + $0x1f8] sm:$0xff]
      %v828 = vld [vmem:[%s213 + $0x200] sm:$0xff]
      %v829 = vld [vmem:[%s213 + $0x240] sm:$0xff]
      %v830 = vld [vmem:[%s213 + $0x248] sm:$0xff]
      %v831 = vld [vmem:[%s213 + $0x288] sm:$0xff]
      %v832 = vld [vmem:[%s213 + $0x290] sm:$0xff]
      %v833 = vld [vmem:[%s213 + $0x2d0] sm:$0xff]
      %v834 = vld [vmem:[%s213 + $0x2d8] sm:$0xff]
      %v835 = vld [vmem:[%s213 + $0x318] sm:$0xff]
      %v836 = vld [vmem:[%s213 + $0x320] sm:$0xff]
      %v837 = vld [vmem:[%s213 + $0x360] sm:$0xff]
      %v838 = vld [vmem:[%s213 + $0x368] sm:$0xff]
      %v839 = vld [vmem:[%s213 + $0x3a8] sm:$0xff]
      %v840 = vld [vmem:[%s213 + $0x3b0] sm:$0xff]
      %v841 = vld [vmem:[%s213 + $0x3f0] sm:$0xff]
      %v842 = vld [vmem:[%s213 + $0x3f8] sm:$0xff]
      %v843 = vld [vmem:[%s213 + $0x438] sm:$0xff]
      %v844 = vld [vmem:[%s213 + $0x440] sm:$0xff]
      %v845 = vld [vmem:[%s213 + $0x10] sm:$0x1]
      %v846 = vld [vmem:[%s213 + $0x58] sm:$0x1]
      %v847 = vld [vmem:[%s213 + $0xa0] sm:$0x1]
      %v848 = vld [vmem:[%s213 + $0xe8] sm:$0x1]
      %v849 = vld [vmem:[%s213 + $0x130] sm:$0x1]
      %v850 = vld [vmem:[%s213 + $0x178] sm:$0x1]
      %v851 = vld [vmem:[%s213 + $0x1c0] sm:$0x1]
      %v852 = vld [vmem:[%s213 + $0x208] sm:$0x1]
      %v853 = vld [vmem:[%s213 + $0x250] sm:$0x1]
      %v854 = vld [vmem:[%s213 + $0x298] sm:$0x1]
      %v855 = vld [vmem:[%s213 + $0x2e0] sm:$0x1]
      %v856 = vld [vmem:[%s213 + $0x328] sm:$0x1]
      %v857 = vld [vmem:[%s213 + $0x370] sm:$0x1]
      %v858 = vld [vmem:[%s213 + $0x3b8] sm:$0x1]
      %v859 = vld [vmem:[%s213 + $0x400] sm:$0x1]
      %v860 = vld [vmem:[%s213 + $0x448] sm:$0x1]
      %862 = vset.pattern.permute.xlu0 32
      %863 = vperm.xlu0 %862, %v750
      %v864 = vpop.permute.xlu0 %863
      %867 = vset.pattern.permute.xlu0 32
      %868 = vperm.xlu0 %867, %v752
      %v869 = vpop.permute.xlu0 %868
      %872 = vset.pattern.permute.xlu0 32
      %873 = vperm.xlu0 %872, %v754
      %v874 = vpop.permute.xlu0 %873
      %877 = vset.pattern.permute.xlu0 32
      %878 = vperm.xlu0 %877, %v756
      %v879 = vpop.permute.xlu0 %878
      %882 = vset.pattern.permute.xlu0 32
      %883 = vperm.xlu0 %882, %v758
      %v884 = vpop.permute.xlu0 %883
      %887 = vset.pattern.permute.xlu0 32
      %888 = vperm.xlu0 %887, %v760
      %v889 = vpop.permute.xlu0 %888
      %892 = vset.pattern.permute.xlu0 32
      %893 = vperm.xlu0 %892, %v762
      %v894 = vpop.permute.xlu0 %893
      %897 = vset.pattern.permute.xlu0 32
      %898 = vperm.xlu0 %897, %v764
      %v899 = vpop.permute.xlu0 %898
      %902 = vset.pattern.permute.xlu0 32
      %903 = vperm.xlu0 %902, %v766
      %v904 = vpop.permute.xlu0 %903
      %907 = vset.pattern.permute.xlu0 32
      %908 = vperm.xlu0 %907, %v768
      %v909 = vpop.permute.xlu0 %908
      %912 = vset.pattern.permute.xlu0 32
      %913 = vperm.xlu0 %912, %v770
      %v914 = vpop.permute.xlu0 %913
      %917 = vset.pattern.permute.xlu0 32
      %918 = vperm.xlu0 %917, %v772
      %v919 = vpop.permute.xlu0 %918
      %922 = vset.pattern.permute.xlu0 32
      %923 = vperm.xlu0 %922, %v774
      %v924 = vpop.permute.xlu0 %923
      %927 = vset.pattern.permute.xlu0 32
      %928 = vperm.xlu0 %927, %v776
      %v929 = vpop.permute.xlu0 %928
      %932 = vset.pattern.permute.xlu0 32
      %933 = vperm.xlu0 %932, %v778
      %v934 = vpop.permute.xlu0 %933
      %937 = vset.pattern.permute.xlu0 32
      %938 = vperm.xlu0 %937, %v780
      %v939 = vpop.permute.xlu0 %938
      %942 = vset.pattern.permute.xlu0 32
      %943 = vperm.xlu0 %942, %v782
      %v944 = vpop.permute.xlu0 %943
      %947 = vset.pattern.permute.xlu0 32
      %948 = vperm.xlu0 %947, %v784
      %v949 = vpop.permute.xlu0 %948
      %952 = vset.pattern.permute.xlu0 32
      %953 = vperm.xlu0 %952, %v786
      %v954 = vpop.permute.xlu0 %953
      %957 = vset.pattern.permute.xlu0 32
      %958 = vperm.xlu0 %957, %v788
      %v959 = vpop.permute.xlu0 %958
      %962 = vset.pattern.permute.xlu0 32
      %963 = vperm.xlu0 %962, %v790
      %v964 = vpop.permute.xlu0 %963
      %967 = vset.pattern.permute.xlu0 32
      %968 = vperm.xlu0 %967, %v792
      %v969 = vpop.permute.xlu0 %968
      %972 = vset.pattern.permute.xlu0 32
      %973 = vperm.xlu0 %972, %v794
      %v974 = vpop.permute.xlu0 %973
      %977 = vset.pattern.permute.xlu0 32
      %978 = vperm.xlu0 %977, %v796
      %v979 = vpop.permute.xlu0 %978
      %982 = vset.pattern.permute.xlu0 32
      %983 = vperm.xlu0 %982, %v798
      %v984 = vpop.permute.xlu0 %983
      %987 = vset.pattern.permute.xlu0 32
      %988 = vperm.xlu0 %987, %v800
      %v989 = vpop.permute.xlu0 %988
      %992 = vset.pattern.permute.xlu0 32
      %993 = vperm.xlu0 %992, %v802
      %v994 = vpop.permute.xlu0 %993
      %997 = vset.pattern.permute.xlu0 32
      %998 = vperm.xlu0 %997, %v804
      %v999 = vpop.permute.xlu0 %998
      %1002 = vset.pattern.permute.xlu0 32
      %1003 = vperm.xlu0 %1002, %v806
      %v1004 = vpop.permute.xlu0 %1003
      %1007 = vset.pattern.permute.xlu0 32
      %1008 = vperm.xlu0 %1007, %v808
      %v1009 = vpop.permute.xlu0 %1008
      %1012 = vset.pattern.permute.xlu0 32
      %1013 = vperm.xlu0 %1012, %v810
      %v1014 = vpop.permute.xlu0 %1013
      %1017 = vset.pattern.permute.xlu0 32
      %1018 = vperm.xlu0 %1017, %v812
      %v1019 = vpop.permute.xlu0 %1018
      %v1021 = vmul.f32 %v813, %v864
      %v1022 = vmul.f32 %v814, %v869
      %v1023 = vmul.f32 %v815, %v874
      %v1024 = vmul.f32 %v816, %v879
      %v1025 = vmul.f32 %v817, %v884
      %v1026 = vmul.f32 %v818, %v889
      %v1027 = vmul.f32 %v819, %v894
      %v1028 = vmul.f32 %v820, %v899
      %v1029 = vmul.f32 %v821, %v904
      %v1030 = vmul.f32 %v822, %v909
      %v1031 = vmul.f32 %v823, %v914
      %v1032 = vmul.f32 %v824, %v919
      %v1033 = vmul.f32 %v825, %v924
      %v1034 = vmul.f32 %v826, %v929
      %v1035 = vmul.f32 %v827, %v934
      %v1036 = vmul.f32 %v828, %v939
      %v1037 = vmul.f32 %v829, %v944
      %v1038 = vmul.f32 %v830, %v949
      %v1039 = vmul.f32 %v831, %v954
      %v1040 = vmul.f32 %v832, %v959
      %v1041 = vmul.f32 %v833, %v964
      %v1042 = vmul.f32 %v834, %v969
      %v1043 = vmul.f32 %v835, %v974
      %v1044 = vmul.f32 %v836, %v979
      %v1045 = vmul.f32 %v837, %v984
      %v1046 = vmul.f32 %v838, %v989
      %v1047 = vmul.f32 %v839, %v994
      %v1048 = vmul.f32 %v840, %v999
      %v1049 = vmul.f32 %v841, %v1004
      %v1050 = vmul.f32 %v842, %v1009
      %v1051 = vmul.f32 %v843, %v1014
      %v1052 = vmul.f32 %v844, %v1019
      %vm1053 = vcmask 130048
      %v1054 = vsel %vm1053, %v1021, 0.0
      %v1055 = vsel %vm1053, %v1022, 0.0
      %v1056 = vadd.f32 %v1054, %v1055
      %v1057 = vrot.slane %v1056, 4
      %v1058 = vadd.f32 %v1056, %v1057
      %v1059 = vrot.slane %v1058, 2
      %v1060 = vadd.f32 %v1058, %v1059
      %v1061 = vrot.slane %v1060, 1
      %v1062 = vadd.f32 %v1060, %v1061
      %v1063 = vsel %vm1053, %v1023, 0.0
      %v1064 = vsel %vm1053, %v1024, 0.0
      %v1065 = vadd.f32 %v1063, %v1064
      %v1066 = vrot.slane %v1065, 4
      %v1067 = vadd.f32 %v1065, %v1066
      %v1068 = vrot.slane %v1067, 2
      %v1069 = vadd.f32 %v1067, %v1068
      %v1070 = vrot.slane %v1069, 1
      %v1071 = vadd.f32 %v1069, %v1070
      %v1072 = vsel %vm1053, %v1025, 0.0
      %v1073 = vsel %vm1053, %v1026, 0.0
      %v1074 = vadd.f32 %v1072, %v1073
      %v1075 = vrot.slane %v1074, 4
      %v1076 = vadd.f32 %v1074, %v1075
      %v1077 = vrot.slane %v1076, 2
      %v1078 = vadd.f32 %v1076, %v1077
      %v1079 = vrot.slane %v1078, 1
      %v1080 = vadd.f32 %v1078, %v1079
      %v1081 = vsel %vm1053, %v1027, 0.0
      %v1082 = vsel %vm1053, %v1028, 0.0
      %v1083 = vadd.f32 %v1081, %v1082
      %v1084 = vrot.slane %v1083, 4
      %v1085 = vadd.f32 %v1083, %v1084
      %v1086 = vrot.slane %v1085, 2
      %v1087 = vadd.f32 %v1085, %v1086
      %v1088 = vrot.slane %v1087, 1
      %v1089 = vadd.f32 %v1087, %v1088
      %v1090 = vsel %vm1053, %v1029, 0.0
      %v1091 = vsel %vm1053, %v1030, 0.0
      %v1092 = vadd.f32 %v1090, %v1091
      %v1093 = vrot.slane %v1092, 4
      %v1094 = vadd.f32 %v1092, %v1093
      %v1095 = vrot.slane %v1094, 2
      %v1096 = vadd.f32 %v1094, %v1095
      %v1097 = vrot.slane %v1096, 1
      %v1098 = vadd.f32 %v1096, %v1097
      %v1099 = vsel %vm1053, %v1031, 0.0
      %v1100 = vsel %vm1053, %v1032, 0.0
      %v1101 = vadd.f32 %v1099, %v1100
      %v1102 = vrot.slane %v1101, 4
      %v1103 = vadd.f32 %v1101, %v1102
      %v1104 = vrot.slane %v1103, 2
      %v1105 = vadd.f32 %v1103, %v1104
      %v1106 = vrot.slane %v1105, 1
      %v1107 = vadd.f32 %v1105, %v1106
      %v1108 = vsel %vm1053, %v1033, 0.0
      %v1109 = vsel %vm1053, %v1034, 0.0
      %v1110 = vadd.f32 %v1108, %v1109
      %v1111 = vrot.slane %v1110, 4
      %v1112 = vadd.f32 %v1110, %v1111
      %v1113 = vrot.slane %v1112, 2
      %v1114 = vadd.f32 %v1112, %v1113
      %v1115 = vrot.slane %v1114, 1
      %v1116 = vadd.f32 %v1114, %v1115
      %v1117 = vsel %vm1053, %v1035, 0.0
      %v1118 = vsel %vm1053, %v1036, 0.0
      %v1119 = vadd.f32 %v1117, %v1118
      %v1120 = vrot.slane %v1119, 4
      %v1121 = vadd.f32 %v1119, %v1120
      %v1122 = vrot.slane %v1121, 2
      %v1123 = vadd.f32 %v1121, %v1122
      %v1124 = vrot.slane %v1123, 1
      %v1125 = vadd.f32 %v1123, %v1124
      %v1126 = vsel %vm1053, %v1037, 0.0
      %v1127 = vsel %vm1053, %v1038, 0.0
      %v1128 = vadd.f32 %v1126, %v1127
      %v1129 = vrot.slane %v1128, 4
      %v1130 = vadd.f32 %v1128, %v1129
      %v1131 = vrot.slane %v1130, 2
      %v1132 = vadd.f32 %v1130, %v1131
      %v1133 = vrot.slane %v1132, 1
      %v1134 = vadd.f32 %v1132, %v1133
      %v1135 = vsel %vm1053, %v1039, 0.0
      %v1136 = vsel %vm1053, %v1040, 0.0
      %v1137 = vadd.f32 %v1135, %v1136
      %v1138 = vrot.slane %v1137, 4
      %v1139 = vadd.f32 %v1137, %v1138
      %v1140 = vrot.slane %v1139, 2
      %v1141 = vadd.f32 %v1139, %v1140
      %v1142 = vrot.slane %v1141, 1
      %v1143 = vadd.f32 %v1141, %v1142
      %v1144 = vsel %vm1053, %v1041, 0.0
      %v1145 = vsel %vm1053, %v1042, 0.0
      %v1146 = vadd.f32 %v1144, %v1145
      %v1147 = vrot.slane %v1146, 4
      %v1148 = vadd.f32 %v1146, %v1147
      %v1149 = vrot.slane %v1148, 2
      %v1150 = vadd.f32 %v1148, %v1149
      %v1151 = vrot.slane %v1150, 1
      %v1152 = vadd.f32 %v1150, %v1151
      %v1153 = vsel %vm1053, %v1043, 0.0
      %v1154 = vsel %vm1053, %v1044, 0.0
      %v1155 = vadd.f32 %v1153, %v1154
      %v1156 = vrot.slane %v1155, 4
      %v1157 = vadd.f32 %v1155, %v1156
      %v1158 = vrot.slane %v1157, 2
      %v1159 = vadd.f32 %v1157, %v1158
      %v1160 = vrot.slane %v1159, 1
      %v1161 = vadd.f32 %v1159, %v1160
      %v1162 = vsel %vm1053, %v1045, 0.0
      %v1163 = vsel %vm1053, %v1046, 0.0
      %v1164 = vadd.f32 %v1162, %v1163
      %v1165 = vrot.slane %v1164, 4
      %v1166 = vadd.f32 %v1164, %v1165
      %v1167 = vrot.slane %v1166, 2
      %v1168 = vadd.f32 %v1166, %v1167
      %v1169 = vrot.slane %v1168, 1
      %v1170 = vadd.f32 %v1168, %v1169
      %v1171 = vsel %vm1053, %v1047, 0.0
      %v1172 = vsel %vm1053, %v1048, 0.0
      %v1173 = vadd.f32 %v1171, %v1172
      %v1174 = vrot.slane %v1173, 4
      %v1175 = vadd.f32 %v1173, %v1174
      %v1176 = vrot.slane %v1175, 2
      %v1177 = vadd.f32 %v1175, %v1176
      %v1178 = vrot.slane %v1177, 1
      %v1179 = vadd.f32 %v1177, %v1178
      %v1180 = vsel %vm1053, %v1049, 0.0
      %v1181 = vsel %vm1053, %v1050, 0.0
      %v1182 = vadd.f32 %v1180, %v1181
      %v1183 = vrot.slane %v1182, 4
      %v1184 = vadd.f32 %v1182, %v1183
      %v1185 = vrot.slane %v1184, 2
      %v1186 = vadd.f32 %v1184, %v1185
      %v1187 = vrot.slane %v1186, 1
      %v1188 = vadd.f32 %v1186, %v1187
      %v1189 = vsel %vm1053, %v1051, 0.0
      %v1190 = vsel %vm1053, %v1052, 0.0
      %v1191 = vadd.f32 %v1189, %v1190
      %v1192 = vrot.slane %v1191, 4
      %v1193 = vadd.f32 %v1191, %v1192
      %v1194 = vrot.slane %v1193, 2
      %v1195 = vadd.f32 %v1193, %v1194
      %v1196 = vrot.slane %v1195, 1
      %v1197 = vadd.f32 %v1195, %v1196
      %v1198 = vadd.f32 %v1062, %v845
      %v1199 = vadd.f32 %v1071, %v846
      %v1200 = vadd.f32 %v1080, %v847
      %v1201 = vadd.f32 %v1089, %v848
      %v1202 = vadd.f32 %v1098, %v849
      %v1203 = vadd.f32 %v1107, %v850
      %v1204 = vadd.f32 %v1116, %v851
      %v1205 = vadd.f32 %v1125, %v852
      %v1206 = vadd.f32 %v1134, %v853
      %v1207 = vadd.f32 %v1143, %v854
      %v1208 = vadd.f32 %v1152, %v855
      %v1209 = vadd.f32 %v1161, %v856
      %v1210 = vadd.f32 %v1170, %v857
      %v1211 = vadd.f32 %v1179, %v858
      %v1212 = vadd.f32 %v1188, %v859
      %v1213 = vadd.f32 %v1197, %v860
      %v1214 = vand.u32 2147483647, %v1198
      %v1215 = vand.u32 2147483647, %v1199
      %v1216 = vand.u32 2147483647, %v1200
      %v1217 = vand.u32 2147483647, %v1201
      %v1218 = vand.u32 2147483647, %v1202
      %v1219 = vand.u32 2147483647, %v1203
      %v1220 = vand.u32 2147483647, %v1204
      %v1221 = vand.u32 2147483647, %v1205
      %v1222 = vand.u32 2147483647, %v1206
      %v1223 = vand.u32 2147483647, %v1207
      %v1224 = vand.u32 2147483647, %v1208
      %v1225 = vand.u32 2147483647, %v1209
      %v1226 = vand.u32 2147483647, %v1210
      %v1227 = vand.u32 2147483647, %v1211
      %v1228 = vand.u32 2147483647, %v1212
      %v1229 = vand.u32 2147483647, %v1213
      %v1230 = vsub.f32 0.0, %v1214
      %v1231 = vsub.f32 0.0, %v1215
      %v1232 = vsub.f32 0.0, %v1216
      %v1233 = vsub.f32 0.0, %v1217
      %v1234 = vsub.f32 0.0, %v1218
      %v1235 = vsub.f32 0.0, %v1219
      %v1236 = vsub.f32 0.0, %v1220
      %v1237 = vsub.f32 0.0, %v1221
      %v1238 = vsub.f32 0.0, %v1222
      %v1239 = vsub.f32 0.0, %v1223
      %v1240 = vsub.f32 0.0, %v1224
      %v1241 = vsub.f32 0.0, %v1225
      %v1242 = vsub.f32 0.0, %v1226
      %v1243 = vsub.f32 0.0, %v1227
      %v1244 = vsub.f32 0.0, %v1228
      %v1245 = vsub.f32 0.0, %v1229
      %v1246 = vmul.f32 %v1230, 1.442695
      %v1247 = vpow.pop %v1246
      %v1248 = vmul.f32 %v1231, 1.442695
      %v1249 = vpow.pop %v1248
      %v1250 = vmul.f32 %v1232, 1.442695
      %v1251 = vpow.pop %v1250
      %v1252 = vmul.f32 %v1233, 1.442695
      %v1253 = vpow.pop %v1252
      %v1254 = vmul.f32 %v1234, 1.442695
      %v1255 = vpow.pop %v1254
      %v1256 = vmul.f32 %v1235, 1.442695
      %v1257 = vpow.pop %v1256
      %v1258 = vmul.f32 %v1236, 1.442695
      %v1259 = vpow.pop %v1258
      %v1260 = vmul.f32 %v1237, 1.442695
      %v1261 = vpow.pop %v1260
      %v1262 = vmul.f32 %v1238, 1.442695
      %v1263 = vpow.pop %v1262
      %v1264 = vmul.f32 %v1239, 1.442695
      %v1265 = vpow.pop %v1264
      %v1266 = vmul.f32 %v1240, 1.442695
      %v1267 = vpow.pop %v1266
      %v1268 = vmul.f32 %v1241, 1.442695
      %v1269 = vpow.pop %v1268
      %v1270 = vmul.f32 %v1242, 1.442695
      %v1271 = vpow.pop %v1270
      %v1272 = vmul.f32 %v1243, 1.442695
      %v1273 = vpow.pop %v1272
      %v1274 = vmul.f32 %v1244, 1.442695
      %v1275 = vpow.pop %v1274
      %v1276 = vmul.f32 %v1245, 1.442695
      %v1277 = vpow.pop %v1276
      %vm1278 = vcmp.ge.f32.partialorder %v1198, 0.0
      %vm1279 = vcmp.ge.f32.partialorder %v1199, 0.0
      %vm1280 = vcmp.ge.f32.partialorder %v1200, 0.0
      %vm1281 = vcmp.ge.f32.partialorder %v1201, 0.0
      %vm1282 = vcmp.ge.f32.partialorder %v1202, 0.0
      %vm1283 = vcmp.ge.f32.partialorder %v1203, 0.0
      %vm1284 = vcmp.ge.f32.partialorder %v1204, 0.0
      %vm1285 = vcmp.ge.f32.partialorder %v1205, 0.0
      %vm1286 = vcmp.ge.f32.partialorder %v1206, 0.0
      %vm1287 = vcmp.ge.f32.partialorder %v1207, 0.0
      %vm1288 = vcmp.ge.f32.partialorder %v1208, 0.0
      %vm1289 = vcmp.ge.f32.partialorder %v1209, 0.0
      %vm1290 = vcmp.ge.f32.partialorder %v1210, 0.0
      %vm1291 = vcmp.ge.f32.partialorder %v1211, 0.0
      %vm1292 = vcmp.ge.f32.partialorder %v1212, 0.0
      %vm1293 = vcmp.ge.f32.partialorder %v1213, 0.0
      %v1294 = vsel %vm1278, 1.0, %v1247
      %v1295 = vsel %vm1279, 1.0, %v1249
      %v1296 = vsel %vm1280, 1.0, %v1251
      %v1297 = vsel %vm1281, 1.0, %v1253
      %v1298 = vsel %vm1282, 1.0, %v1255
      %v1299 = vsel %vm1283, 1.0, %v1257
      %v1300 = vsel %vm1284, 1.0, %v1259
      %v1301 = vsel %vm1285, 1.0, %v1261
      %v1302 = vsel %vm1286, 1.0, %v1263
      %v1303 = vsel %vm1287, 1.0, %v1265
      %v1304 = vsel %vm1288, 1.0, %v1267
      %v1305 = vsel %vm1289, 1.0, %v1269
      %v1306 = vsel %vm1290, 1.0, %v1271
      %v1307 = vsel %vm1291, 1.0, %v1273
      %v1308 = vsel %vm1292, 1.0, %v1275
      %v1309 = vsel %vm1293, 1.0, %v1277
      %v1310 = vadd.f32 %v1247, 1.0
      %v1311 = vadd.f32 %v1249, 1.0
      %v1312 = vadd.f32 %v1251, 1.0
      %v1313 = vadd.f32 %v1253, 1.0
      %v1314 = vadd.f32 %v1255, 1.0
      %v1315 = vadd.f32 %v1257, 1.0
      %v1316 = vadd.f32 %v1259, 1.0
      %v1317 = vadd.f32 %v1261, 1.0
      %v1318 = vadd.f32 %v1263, 1.0
      %v1319 = vadd.f32 %v1265, 1.0
      %v1320 = vadd.f32 %v1267, 1.0
      %v1321 = vadd.f32 %v1269, 1.0
      %v1322 = vadd.f32 %v1271, 1.0
      %v1323 = vadd.f32 %v1273, 1.0
      %v1324 = vadd.f32 %v1275, 1.0
      %v1325 = vadd.f32 %v1277, 1.0
      %v1326 = vrcp.pop %v1310
      %v1327 = vmul.f32 %v1294, %v1326
      %v1328 = vrcp.pop %v1311
      %v1329 = vmul.f32 %v1295, %v1328
      %v1330 = vrcp.pop %v1312
      %v1331 = vmul.f32 %v1296, %v1330
      %v1332 = vrcp.pop %v1313
      %v1333 = vmul.f32 %v1297, %v1332
      %v1334 = vrcp.pop %v1314
      %v1335 = vmul.f32 %v1298, %v1334
      %v1336 = vrcp.pop %v1315
      %v1337 = vmul.f32 %v1299, %v1336
      %v1338 = vrcp.pop %v1316
      %v1339 = vmul.f32 %v1300, %v1338
      %v1340 = vrcp.pop %v1317
      %v1341 = vmul.f32 %v1301, %v1340
      %v1342 = vrcp.pop %v1318
      %v1343 = vmul.f32 %v1302, %v1342
      %v1344 = vrcp.pop %v1319
      %v1345 = vmul.f32 %v1303, %v1344
      %v1346 = vrcp.pop %v1320
      %v1347 = vmul.f32 %v1304, %v1346
      %v1348 = vrcp.pop %v1321
      %v1349 = vmul.f32 %v1305, %v1348
      %v1350 = vrcp.pop %v1322
      %v1351 = vmul.f32 %v1306, %v1350
      %v1352 = vrcp.pop %v1323
      %v1353 = vmul.f32 %v1307, %v1352
      %v1354 = vrcp.pop %v1324
      %v1355 = vmul.f32 %v1308, %v1354
      %v1356 = vrcp.pop %v1325
      %v1357 = vmul.f32 %v1309, %v1356
      %v1358 = vld [vmem:[%s213 + $0x18] sm:$0xff]
      %v1359 = vld [vmem:[%s213 + $0x20] sm:$0xff]
      %v1360 = vld [vmem:[%s213 + $0x60] sm:$0xff]
      %v1361 = vld [vmem:[%s213 + $0x68] sm:$0xff]
      %v1362 = vld [vmem:[%s213 + $0xa8] sm:$0xff]
      %v1363 = vld [vmem:[%s213 + $0xb0] sm:$0xff]
      %v1364 = vld [vmem:[%s213 + $0xf0] sm:$0xff]
      %v1365 = vld [vmem:[%s213 + $0xf8] sm:$0xff]
      %v1366 = vld [vmem:[%s213 + $0x138] sm:$0xff]
      %v1367 = vld [vmem:[%s213 + $0x140] sm:$0xff]
      %v1368 = vld [vmem:[%s213 + $0x180] sm:$0xff]
      %v1369 = vld [vmem:[%s213 + $0x188] sm:$0xff]
      %v1370 = vld [vmem:[%s213 + $0x1c8] sm:$0xff]
      %v1371 = vld [vmem:[%s213 + $0x1d0] sm:$0xff]
      %v1372 = vld [vmem:[%s213 + $0x210] sm:$0xff]
      %v1373 = vld [vmem:[%s213 + $0x218] sm:$0xff]
      %v1374 = vld [vmem:[%s213 + $0x258] sm:$0xff]
      %v1375 = vld [vmem:[%s213 + $0x260] sm:$0xff]
      %v1376 = vld [vmem:[%s213 + $0x2a0] sm:$0xff]
      %v1377 = vld [vmem:[%s213 + $0x2a8] sm:$0xff]
      %v1378 = vld [vmem:[%s213 + $0x2e8] sm:$0xff]
      %v1379 = vld [vmem:[%s213 + $0x2f0] sm:$0xff]
      %v1380 = vld [vmem:[%s213 + $0x330] sm:$0xff]
      %v1381 = vld [vmem:[%s213 + $0x338] sm:$0xff]
      %v1382 = vld [vmem:[%s213 + $0x378] sm:$0xff]
      %v1383 = vld [vmem:[%s213 + $0x380] sm:$0xff]
      %v1384 = vld [vmem:[%s213 + $0x3c0] sm:$0xff]
      %v1385 = vld [vmem:[%s213 + $0x3c8] sm:$0xff]
      %v1386 = vld [vmem:[%s213 + $0x408] sm:$0xff]
      %v1387 = vld [vmem:[%s213 + $0x410] sm:$0xff]
      %v1388 = vld [vmem:[%s213 + $0x450] sm:$0xff]
      %v1389 = vld [vmem:[%s213 + $0x458] sm:$0xff]
      %v1390 = vlaneseq
      %v1391 = vshrl.u32 %v1390, 7
      %v1392 = vsub.s32 0, %v1391
      %v1393 = vrot.slane %v1327, %v1392
      %v1394 = vlaneseq
      %v1395 = vshrl.u32 %v1394, 7
      %v1396 = vsub.s32 0, %v1395
      %v1397 = vrot.slane %v1329, %v1396
      %v1398 = vlaneseq
      %v1399 = vshrl.u32 %v1398, 7
      %v1400 = vsub.s32 0, %v1399
      %v1401 = vrot.slane %v1331, %v1400
      %v1402 = vlaneseq
      %v1403 = vshrl.u32 %v1402, 7
      %v1404 = vsub.s32 0, %v1403
      %v1405 = vrot.slane %v1333, %v1404
      %v1406 = vlaneseq
      %v1407 = vshrl.u32 %v1406, 7
      %v1408 = vsub.s32 0, %v1407
      %v1409 = vrot.slane %v1335, %v1408
      %v1410 = vlaneseq
      %v1411 = vshrl.u32 %v1410, 7
      %v1412 = vsub.s32 0, %v1411
      %v1413 = vrot.slane %v1337, %v1412
      %v1414 = vlaneseq
      %v1415 = vshrl.u32 %v1414, 7
      %v1416 = vsub.s32 0, %v1415
      %v1417 = vrot.slane %v1339, %v1416
      %v1418 = vlaneseq
      %v1419 = vshrl.u32 %v1418, 7
      %v1420 = vsub.s32 0, %v1419
      %v1421 = vrot.slane %v1341, %v1420
      %v1422 = vlaneseq
      %v1423 = vshrl.u32 %v1422, 7
      %v1424 = vsub.s32 0, %v1423
      %v1425 = vrot.slane %v1343, %v1424
      %v1426 = vlaneseq
      %v1427 = vshrl.u32 %v1426, 7
      %v1428 = vsub.s32 0, %v1427
      %v1429 = vrot.slane %v1345, %v1428
      %v1430 = vlaneseq
      %v1431 = vshrl.u32 %v1430, 7
      %v1432 = vsub.s32 0, %v1431
      %v1433 = vrot.slane %v1347, %v1432
      %v1434 = vlaneseq
      %v1435 = vshrl.u32 %v1434, 7
      %v1436 = vsub.s32 0, %v1435
      %v1437 = vrot.slane %v1349, %v1436
      %v1438 = vlaneseq
      %v1439 = vshrl.u32 %v1438, 7
      %v1440 = vsub.s32 0, %v1439
      %v1441 = vrot.slane %v1351, %v1440
      %v1442 = vlaneseq
      %v1443 = vshrl.u32 %v1442, 7
      %v1444 = vsub.s32 0, %v1443
      %v1445 = vrot.slane %v1353, %v1444
      %v1446 = vlaneseq
      %v1447 = vshrl.u32 %v1446, 7
      %v1448 = vsub.s32 0, %v1447
      %v1449 = vrot.slane %v1355, %v1448
      %v1450 = vlaneseq
      %v1451 = vshrl.u32 %v1450, 7
      %v1452 = vsub.s32 0, %v1451
      %v1453 = vrot.slane %v1357, %v1452
      %v1454 = vmul.f32 %v1358, %v1393
      %v1455 = vmul.f32 %v1359, %v1393
      %v1456 = vmul.f32 %v1360, %v1397
      %v1457 = vmul.f32 %v1361, %v1397
      %v1458 = vmul.f32 %v1362, %v1401
      %v1459 = vmul.f32 %v1363, %v1401
      %v1460 = vmul.f32 %v1364, %v1405
      %v1461 = vmul.f32 %v1365, %v1405
      %v1462 = vmul.f32 %v1366, %v1409
      %v1463 = vmul.f32 %v1367, %v1409
      %v1464 = vmul.f32 %v1368, %v1413
      %v1465 = vmul.f32 %v1369, %v1413
      %v1466 = vmul.f32 %v1370, %v1417
      %v1467 = vmul.f32 %v1371, %v1417
      %v1468 = vmul.f32 %v1372, %v1421
      %v1469 = vmul.f32 %v1373, %v1421
      %v1470 = vmul.f32 %v1374, %v1425
      %v1471 = vmul.f32 %v1375, %v1425
      %v1472 = vmul.f32 %v1376, %v1429
      %v1473 = vmul.f32 %v1377, %v1429
      %v1474 = vmul.f32 %v1378, %v1433
      %v1475 = vmul.f32 %v1379, %v1433
      %v1476 = vmul.f32 %v1380, %v1437
      %v1477 = vmul.f32 %v1381, %v1437
      %v1478 = vmul.f32 %v1382, %v1441
      %v1479 = vmul.f32 %v1383, %v1441
      %v1480 = vmul.f32 %v1384, %v1445
      %v1481 = vmul.f32 %v1385, %v1445
      %v1482 = vmul.f32 %v1386, %v1449
      %v1483 = vmul.f32 %v1387, %v1449
      %v1484 = vmul.f32 %v1388, %v1453
      %v1485 = vmul.f32 %v1389, %v1453
      %v1486 = vsel %vm1053, %v1454, 0.0
      %1487 = vadd.xlane.f32.xlu0 %v1486
      %v1488 = vpop.xlane.xlu0 %1487
      %v1489 = vsel %vm1053, %v1455, 0.0
      %1490 = vadd.xlane.f32.xlu0 %v1489
      %v1491 = vpop.xlane.xlu0 %1490
      %v1492 = vsel %vm1053, %v1456, 0.0
      %1493 = vadd.xlane.f32.xlu0 %v1492
      %v1494 = vpop.xlane.xlu0 %1493
      %v1495 = vsel %vm1053, %v1457, 0.0
      %1496 = vadd.xlane.f32.xlu0 %v1495
      %v1497 = vpop.xlane.xlu0 %1496
      %v1498 = vsel %vm1053, %v1458, 0.0
      %1499 = vadd.xlane.f32.xlu0 %v1498
      %v1500 = vpop.xlane.xlu0 %1499
      %v1501 = vsel %vm1053, %v1459, 0.0
      %1502 = vadd.xlane.f32.xlu0 %v1501
      %v1503 = vpop.xlane.xlu0 %1502
      %v1504 = vsel %vm1053, %v1460, 0.0
      %1505 = vadd.xlane.f32.xlu0 %v1504
      %v1506 = vpop.xlane.xlu0 %1505
      %v1507 = vsel %vm1053, %v1461, 0.0
      %1508 = vadd.xlane.f32.xlu0 %v1507
      %v1509 = vpop.xlane.xlu0 %1508
      %v1510 = vsel %vm1053, %v1462, 0.0
      %1511 = vadd.xlane.f32.xlu0 %v1510
      %v1512 = vpop.xlane.xlu0 %1511
      %v1513 = vsel %vm1053, %v1463, 0.0
      %1514 = vadd.xlane.f32.xlu0 %v1513
      %v1515 = vpop.xlane.xlu0 %1514
      %v1516 = vsel %vm1053, %v1464, 0.0
      %1517 = vadd.xlane.f32.xlu0 %v1516
      %v1518 = vpop.xlane.xlu0 %1517
      %v1519 = vsel %vm1053, %v1465, 0.0
      %1520 = vadd.xlane.f32.xlu0 %v1519
      %v1521 = vpop.xlane.xlu0 %1520
      %v1522 = vsel %vm1053, %v1466, 0.0
      %1523 = vadd.xlane.f32.xlu0 %v1522
      %v1524 = vpop.xlane.xlu0 %1523
      %v1525 = vsel %vm1053, %v1467, 0.0
      %1526 = vadd.xlane.f32.xlu0 %v1525
      %v1527 = vpop.xlane.xlu0 %1526
      %v1528 = vsel %vm1053, %v1468, 0.0
      %1529 = vadd.xlane.f32.xlu0 %v1528
      %v1530 = vpop.xlane.xlu0 %1529
      %v1531 = vsel %vm1053, %v1469, 0.0
      %1532 = vadd.xlane.f32.xlu0 %v1531
      %v1533 = vpop.xlane.xlu0 %1532
      %v1534 = vsel %vm1053, %v1470, 0.0
      %1535 = vadd.xlane.f32.xlu0 %v1534
      %v1536 = vpop.xlane.xlu0 %1535
      %v1537 = vsel %vm1053, %v1471, 0.0
      %1538 = vadd.xlane.f32.xlu0 %v1537
      %v1539 = vpop.xlane.xlu0 %1538
      %v1540 = vsel %vm1053, %v1472, 0.0
      %1541 = vadd.xlane.f32.xlu0 %v1540
      %v1542 = vpop.xlane.xlu0 %1541
      %v1543 = vsel %vm1053, %v1473, 0.0
      %1544 = vadd.xlane.f32.xlu0 %v1543
      %v1545 = vpop.xlane.xlu0 %1544
      %v1546 = vsel %vm1053, %v1474, 0.0
      %1547 = vadd.xlane.f32.xlu0 %v1546
      %v1548 = vpop.xlane.xlu0 %1547
      %v1549 = vsel %vm1053, %v1475, 0.0
      %1550 = vadd.xlane.f32.xlu0 %v1549
      %v1551 = vpop.xlane.xlu0 %1550
      %v1552 = vsel %vm1053, %v1476, 0.0
      %1553 = vadd.xlane.f32.xlu0 %v1552
      %v1554 = vpop.xlane.xlu0 %1553
      %v1555 = vsel %vm1053, %v1477, 0.0
      %1556 = vadd.xlane.f32.xlu0 %v1555
      %v1557 = vpop.xlane.xlu0 %1556
      %v1558 = vsel %vm1053, %v1478, 0.0
      %1559 = vadd.xlane.f32.xlu0 %v1558
      %v1560 = vpop.xlane.xlu0 %1559
      %v1561 = vsel %vm1053, %v1479, 0.0
      %1562 = vadd.xlane.f32.xlu0 %v1561
      %v1563 = vpop.xlane.xlu0 %1562
      %v1564 = vsel %vm1053, %v1480, 0.0
      %1565 = vadd.xlane.f32.xlu0 %v1564
      %v1566 = vpop.xlane.xlu0 %1565
      %v1567 = vsel %vm1053, %v1481, 0.0
      %1568 = vadd.xlane.f32.xlu0 %v1567
      %v1569 = vpop.xlane.xlu0 %1568
      %v1570 = vsel %vm1053, %v1482, 0.0
      %1571 = vadd.xlane.f32.xlu0 %v1570
      %v1572 = vpop.xlane.xlu0 %1571
      %v1573 = vsel %vm1053, %v1483, 0.0
      %1574 = vadd.xlane.f32.xlu0 %v1573
      %v1575 = vpop.xlane.xlu0 %1574
      %v1576 = vsel %vm1053, %v1484, 0.0
      %1577 = vadd.xlane.f32.xlu0 %v1576
      %v1578 = vpop.xlane.xlu0 %1577
      %v1579 = vsel %vm1053, %v1485, 0.0
      %1580 = vadd.xlane.f32.xlu0 %v1579
      %v1581 = vpop.xlane.xlu0 %1580
      %v1582 = vadd.f32 %v1488, %v1358
      %v1583 = vadd.f32 %v1491, %v1359
      %v1584 = vadd.f32 %v1494, %v1360
      %v1585 = vadd.f32 %v1497, %v1361
      %v1586 = vadd.f32 %v1500, %v1362
      %v1587 = vadd.f32 %v1503, %v1363
      %v1588 = vadd.f32 %v1506, %v1364
      %v1589 = vadd.f32 %v1509, %v1365
      %v1590 = vadd.f32 %v1512, %v1366
      %v1591 = vadd.f32 %v1515, %v1367
      %v1592 = vadd.f32 %v1518, %v1368
      %v1593 = vadd.f32 %v1521, %v1369
      %v1594 = vadd.f32 %v1524, %v1370
      %v1595 = vadd.f32 %v1527, %v1371
      %v1596 = vadd.f32 %v1530, %v1372
      %v1597 = vadd.f32 %v1533, %v1373
      %v1598 = vadd.f32 %v1536, %v1374
      %v1599 = vadd.f32 %v1539, %v1375
      %v1600 = vadd.f32 %v1542, %v1376
      %v1601 = vadd.f32 %v1545, %v1377
      %v1602 = vadd.f32 %v1548, %v1378
      %v1603 = vadd.f32 %v1551, %v1379
      %v1604 = vadd.f32 %v1554, %v1380
      %v1605 = vadd.f32 %v1557, %v1381
      %v1606 = vadd.f32 %v1560, %v1382
      %v1607 = vadd.f32 %v1563, %v1383
      %v1608 = vadd.f32 %v1566, %v1384
      %v1609 = vadd.f32 %v1569, %v1385
      %v1610 = vadd.f32 %v1572, %v1386
      %v1611 = vadd.f32 %v1575, %v1387
      %v1612 = vadd.f32 %v1578, %v1388
      %v1613 = vadd.f32 %v1581, %v1389
      %v1614 = vand.u32 2147483647, %v1582
      %v1615 = vand.u32 2147483647, %v1583
      %v1616 = vand.u32 2147483647, %v1584
      %v1617 = vand.u32 2147483647, %v1585
      %v1618 = vand.u32 2147483647, %v1586
      %v1619 = vand.u32 2147483647, %v1587
      %v1620 = vand.u32 2147483647, %v1588
      %v1621 = vand.u32 2147483647, %v1589
      %v1622 = vand.u32 2147483647, %v1590
      %v1623 = vand.u32 2147483647, %v1591
      %v1624 = vand.u32 2147483647, %v1592
      %v1625 = vand.u32 2147483647, %v1593
      %v1626 = vand.u32 2147483647, %v1594
      %v1627 = vand.u32 2147483647, %v1595
      %v1628 = vand.u32 2147483647, %v1596
      %v1629 = vand.u32 2147483647, %v1597
      %v1630 = vand.u32 2147483647, %v1598
      %v1631 = vand.u32 2147483647, %v1599
      %v1632 = vand.u32 2147483647, %v1600
      %v1633 = vand.u32 2147483647, %v1601
      %v1634 = vand.u32 2147483647, %v1602
      %v1635 = vand.u32 2147483647, %v1603
      %v1636 = vand.u32 2147483647, %v1604
      %v1637 = vand.u32 2147483647, %v1605
      %v1638 = vand.u32 2147483647, %v1606
      %v1639 = vand.u32 2147483647, %v1607
      %v1640 = vand.u32 2147483647, %v1608
      %v1641 = vand.u32 2147483647, %v1609
      %v1642 = vand.u32 2147483647, %v1610
      %v1643 = vand.u32 2147483647, %v1611
      %v1644 = vand.u32 2147483647, %v1612
      %v1645 = vand.u32 2147483647, %v1613
      %v1646 = vsub.f32 0.0, %v1614
      %v1647 = vsub.f32 0.0, %v1615
      %v1648 = vsub.f32 0.0, %v1616
      %v1649 = vsub.f32 0.0, %v1617
      %v1650 = vsub.f32 0.0, %v1618
      %v1651 = vsub.f32 0.0, %v1619
      %v1652 = vsub.f32 0.0, %v1620
      %v1653 = vsub.f32 0.0, %v1621
      %v1654 = vsub.f32 0.0, %v1622
      %v1655 = vsub.f32 0.0, %v1623
      %v1656 = vsub.f32 0.0, %v1624
      %v1657 = vsub.f32 0.0, %v1625
      %v1658 = vsub.f32 0.0, %v1626
      %v1659 = vsub.f32 0.0, %v1627
      %v1660 = vsub.f32 0.0, %v1628
      %v1661 = vsub.f32 0.0, %v1629
      %v1662 = vsub.f32 0.0, %v1630
      %v1663 = vsub.f32 0.0, %v1631
      %v1664 = vsub.f32 0.0, %v1632
      %v1665 = vsub.f32 0.0, %v1633
      %v1666 = vsub.f32 0.0, %v1634
      %v1667 = vsub.f32 0.0, %v1635
      %v1668 = vsub.f32 0.0, %v1636
      %v1669 = vsub.f32 0.0, %v1637
      %v1670 = vsub.f32 0.0, %v1638
      %v1671 = vsub.f32 0.0, %v1639
      %v1672 = vsub.f32 0.0, %v1640
      %v1673 = vsub.f32 0.0, %v1641
      %v1674 = vsub.f32 0.0, %v1642
      %v1675 = vsub.f32 0.0, %v1643
      %v1676 = vsub.f32 0.0, %v1644
      %v1677 = vsub.f32 0.0, %v1645
      %v1678 = vmul.f32 %v1646, 1.442695
      %v1679 = vpow.pop %v1678
      %v1680 = vmul.f32 %v1647, 1.442695
      %v1681 = vpow.pop %v1680
      %v1682 = vmul.f32 %v1648, 1.442695
      %v1683 = vpow.pop %v1682
      %v1684 = vmul.f32 %v1649, 1.442695
      %v1685 = vpow.pop %v1684
      %v1686 = vmul.f32 %v1650, 1.442695
      %v1687 = vpow.pop %v1686
      %v1688 = vmul.f32 %v1651, 1.442695
      %v1689 = vpow.pop %v1688
      %v1690 = vmul.f32 %v1652, 1.442695
      %v1691 = vpow.pop %v1690
      %v1692 = vmul.f32 %v1653, 1.442695
      %v1693 = vpow.pop %v1692
      %v1694 = vmul.f32 %v1654, 1.442695
      %v1695 = vpow.pop %v1694
      %v1696 = vmul.f32 %v1655, 1.442695
      %v1697 = vpow.pop %v1696
      %v1698 = vmul.f32 %v1656, 1.442695
      %v1699 = vpow.pop %v1698
      %v1700 = vmul.f32 %v1657, 1.442695
      %v1701 = vpow.pop %v1700
      %v1702 = vmul.f32 %v1658, 1.442695
      %v1703 = vpow.pop %v1702
      %v1704 = vmul.f32 %v1659, 1.442695
      %v1705 = vpow.pop %v1704
      %v1706 = vmul.f32 %v1660, 1.442695
      %v1707 = vpow.pop %v1706
      %v1708 = vmul.f32 %v1661, 1.442695
      %v1709 = vpow.pop %v1708
      %v1710 = vmul.f32 %v1662, 1.442695
      %v1711 = vpow.pop %v1710
      %v1712 = vmul.f32 %v1663, 1.442695
      %v1713 = vpow.pop %v1712
      %v1714 = vmul.f32 %v1664, 1.442695
      %v1715 = vpow.pop %v1714
      %v1716 = vmul.f32 %v1665, 1.442695
      %v1717 = vpow.pop %v1716
      %v1718 = vmul.f32 %v1666, 1.442695
      %v1719 = vpow.pop %v1718
      %v1720 = vmul.f32 %v1667, 1.442695
      %v1721 = vpow.pop %v1720
      %v1722 = vmul.f32 %v1668, 1.442695
      %v1723 = vpow.pop %v1722
      %v1724 = vmul.f32 %v1669, 1.442695
      %v1725 = vpow.pop %v1724
      %v1726 = vmul.f32 %v1670, 1.442695
      %v1727 = vpow.pop %v1726
      %v1728 = vmul.f32 %v1671, 1.442695
      %v1729 = vpow.pop %v1728
      %v1730 = vmul.f32 %v1672, 1.442695
      %v1731 = vpow.pop %v1730
      %v1732 = vmul.f32 %v1673, 1.442695
      %v1733 = vpow.pop %v1732
      %v1734 = vmul.f32 %v1674, 1.442695
      %v1735 = vpow.pop %v1734
      %v1736 = vmul.f32 %v1675, 1.442695
      %v1737 = vpow.pop %v1736
      %v1738 = vmul.f32 %v1676, 1.442695
      %v1739 = vpow.pop %v1738
      %v1740 = vmul.f32 %v1677, 1.442695
      %v1741 = vpow.pop %v1740
      %vm1742 = vcmp.ge.f32.partialorder %v1582, 0.0
      %vm1743 = vcmp.ge.f32.partialorder %v1583, 0.0
      %vm1744 = vcmp.ge.f32.partialorder %v1584, 0.0
      %vm1745 = vcmp.ge.f32.partialorder %v1585, 0.0
      %vm1746 = vcmp.ge.f32.partialorder %v1586, 0.0
      %vm1747 = vcmp.ge.f32.partialorder %v1587, 0.0
      %vm1748 = vcmp.ge.f32.partialorder %v1588, 0.0
      %vm1749 = vcmp.ge.f32.partialorder %v1589, 0.0
      %vm1750 = vcmp.ge.f32.partialorder %v1590, 0.0
      %vm1751 = vcmp.ge.f32.partialorder %v1591, 0.0
      %vm1752 = vcmp.ge.f32.partialorder %v1592, 0.0
      %vm1753 = vcmp.ge.f32.partialorder %v1593, 0.0
      %vm1754 = vcmp.ge.f32.partialorder %v1594, 0.0
      %vm1755 = vcmp.ge.f32.partialorder %v1595, 0.0
      %vm1756 = vcmp.ge.f32.partialorder %v1596, 0.0
      %vm1757 = vcmp.ge.f32.partialorder %v1597, 0.0
      %vm1758 = vcmp.ge.f32.partialorder %v1598, 0.0
      %vm1759 = vcmp.ge.f32.partialorder %v1599, 0.0
      %vm1760 = vcmp.ge.f32.partialorder %v1600, 0.0
      %vm1761 = vcmp.ge.f32.partialorder %v1601, 0.0
      %vm1762 = vcmp.ge.f32.partialorder %v1602, 0.0
      %vm1763 = vcmp.ge.f32.partialorder %v1603, 0.0
      %vm1764 = vcmp.ge.f32.partialorder %v1604, 0.0
      %vm1765 = vcmp.ge.f32.partialorder %v1605, 0.0
      %vm1766 = vcmp.ge.f32.partialorder %v1606, 0.0
      %vm1767 = vcmp.ge.f32.partialorder %v1607, 0.0
      %vm1768 = vcmp.ge.f32.partialorder %v1608, 0.0
      %vm1769 = vcmp.ge.f32.partialorder %v1609, 0.0
      %vm1770 = vcmp.ge.f32.partialorder %v1610, 0.0
      %vm1771 = vcmp.ge.f32.partialorder %v1611, 0.0
      %vm1772 = vcmp.ge.f32.partialorder %v1612, 0.0
      %vm1773 = vcmp.ge.f32.partialorder %v1613, 0.0
      %v1774 = vsel %vm1742, 1.0, %v1679
      %v1775 = vsel %vm1743, 1.0, %v1681
      %v1776 = vsel %vm1744, 1.0, %v1683
      %v1777 = vsel %vm1745, 1.0, %v1685
      %v1778 = vsel %vm1746, 1.0, %v1687
      %v1779 = vsel %vm1747, 1.0, %v1689
      %v1780 = vsel %vm1748, 1.0, %v1691
      %v1781 = vsel %vm1749, 1.0, %v1693
      %v1782 = vsel %vm1750, 1.0, %v1695
      %v1783 = vsel %vm1751, 1.0, %v1697
      %v1784 = vsel %vm1752, 1.0, %v1699
      %v1785 = vsel %vm1753, 1.0, %v1701
      %v1786 = vsel %vm1754, 1.0, %v1703
      %v1787 = vsel %vm1755, 1.0, %v1705
      %v1788 = vsel %vm1756, 1.0, %v1707
      %v1789 = vsel %vm1757, 1.0, %v1709
      %v1790 = vsel %vm1758, 1.0, %v1711
      %v1791 = vsel %vm1759, 1.0, %v1713
      %v1792 = vsel %vm1760, 1.0, %v1715
      %v1793 = vsel %vm1761, 1.0, %v1717
      %v1794 = vsel %vm1762, 1.0, %v1719
      %v1795 = vsel %vm1763, 1.0, %v1721
      %v1796 = vsel %vm1764, 1.0, %v1723
      %v1797 = vsel %vm1765, 1.0, %v1725
      %v1798 = vsel %vm1766, 1.0, %v1727
      %v1799 = vsel %vm1767, 1.0, %v1729
      %v1800 = vsel %vm1768, 1.0, %v1731
      %v1801 = vsel %vm1769, 1.0, %v1733
      %v1802 = vsel %vm1770, 1.0, %v1735
      %v1803 = vsel %vm1771, 1.0, %v1737
      %v1804 = vsel %vm1772, 1.0, %v1739
      %v1805 = vsel %vm1773, 1.0, %v1741
      %v1806 = vadd.f32 %v1679, 1.0
      %v1807 = vadd.f32 %v1681, 1.0
      %v1808 = vadd.f32 %v1683, 1.0
      %v1809 = vadd.f32 %v1685, 1.0
      %v1810 = vadd.f32 %v1687, 1.0
      %v1811 = vadd.f32 %v1689, 1.0
      %v1812 = vadd.f32 %v1691, 1.0
      %v1813 = vadd.f32 %v1693, 1.0
      %v1814 = vadd.f32 %v1695, 1.0
      %v1815 = vadd.f32 %v1697, 1.0
      %v1816 = vadd.f32 %v1699, 1.0
      %v1817 = vadd.f32 %v1701, 1.0
      %v1818 = vadd.f32 %v1703, 1.0
      %v1819 = vadd.f32 %v1705, 1.0
      %v1820 = vadd.f32 %v1707, 1.0
      %v1821 = vadd.f32 %v1709, 1.0
      %v1822 = vadd.f32 %v1711, 1.0
      %v1823 = vadd.f32 %v1713, 1.0
      %v1824 = vadd.f32 %v1715, 1.0
      %v1825 = vadd.f32 %v1717, 1.0
      %v1826 = vadd.f32 %v1719, 1.0
      %v1827 = vadd.f32 %v1721, 1.0
      %v1828 = vadd.f32 %v1723, 1.0
      %v1829 = vadd.f32 %v1725, 1.0
      %v1830 = vadd.f32 %v1727, 1.0
      %v1831 = vadd.f32 %v1729, 1.0
      %v1832 = vadd.f32 %v1731, 1.0
      %v1833 = vadd.f32 %v1733, 1.0
      %v1834 = vadd.f32 %v1735, 1.0
      %v1835 = vadd.f32 %v1737, 1.0
      %v1836 = vadd.f32 %v1739, 1.0
      %v1837 = vadd.f32 %v1741, 1.0
      %v1838 = vrcp.pop %v1806
      %v1839 = vmul.f32 %v1774, %v1838
      %v1840 = vrcp.pop %v1807
      %v1841 = vmul.f32 %v1775, %v1840
      %v1842 = vrcp.pop %v1808
      %v1843 = vmul.f32 %v1776, %v1842
      %v1844 = vrcp.pop %v1809
      %v1845 = vmul.f32 %v1777, %v1844
      %v1846 = vrcp.pop %v1810
      %v1847 = vmul.f32 %v1778, %v1846
      %v1848 = vrcp.pop %v1811
      %v1849 = vmul.f32 %v1779, %v1848
      %v1850 = vrcp.pop %v1812
      %v1851 = vmul.f32 %v1780, %v1850
      %v1852 = vrcp.pop %v1813
      %v1853 = vmul.f32 %v1781, %v1852
      %v1854 = vrcp.pop %v1814
      %v1855 = vmul.f32 %v1782, %v1854
      %v1856 = vrcp.pop %v1815
      %v1857 = vmul.f32 %v1783, %v1856
      %v1858 = vrcp.pop %v1816
      %v1859 = vmul.f32 %v1784, %v1858
      %v1860 = vrcp.pop %v1817
      %v1861 = vmul.f32 %v1785, %v1860
      %v1862 = vrcp.pop %v1818
      %v1863 = vmul.f32 %v1786, %v1862
      %v1864 = vrcp.pop %v1819
      %v1865 = vmul.f32 %v1787, %v1864
      %v1866 = vrcp.pop %v1820
      %v1867 = vmul.f32 %v1788, %v1866
      %v1868 = vrcp.pop %v1821
      %v1869 = vmul.f32 %v1789, %v1868
      %v1870 = vrcp.pop %v1822
      %v1871 = vmul.f32 %v1790, %v1870
      %v1872 = vrcp.pop %v1823
      %v1873 = vmul.f32 %v1791, %v1872
      %v1874 = vrcp.pop %v1824
      %v1875 = vmul.f32 %v1792, %v1874
      %v1876 = vrcp.pop %v1825
      %v1877 = vmul.f32 %v1793, %v1876
      %v1878 = vrcp.pop %v1826
      %v1879 = vmul.f32 %v1794, %v1878
      %v1880 = vrcp.pop %v1827
      %v1881 = vmul.f32 %v1795, %v1880
      %v1882 = vrcp.pop %v1828
      %v1883 = vmul.f32 %v1796, %v1882
      %v1884 = vrcp.pop %v1829
      %v1885 = vmul.f32 %v1797, %v1884
      %v1886 = vrcp.pop %v1830
      %v1887 = vmul.f32 %v1798, %v1886
      %v1888 = vrcp.pop %v1831
      %v1889 = vmul.f32 %v1799, %v1888
      %v1890 = vrcp.pop %v1832
      %v1891 = vmul.f32 %v1800, %v1890
      %v1892 = vrcp.pop %v1833
      %v1893 = vmul.f32 %v1801, %v1892
      %v1894 = vrcp.pop %v1834
      %v1895 = vmul.f32 %v1802, %v1894
      %v1896 = vrcp.pop %v1835
      %v1897 = vmul.f32 %v1803, %v1896
      %v1898 = vrcp.pop %v1836
      %v1899 = vmul.f32 %v1804, %v1898
      %v1900 = vrcp.pop %v1837
      %v1901 = vmul.f32 %v1805, %v1900
      %v1902 = vld [vmem:[%s213 + $0x28] sm:$0xff]
      %v1903 = vld [vmem:[%s213 + $0x30] sm:$0xff]
      %v1904 = vld [vmem:[%s213 + $0x70] sm:$0xff]
      %v1905 = vld [vmem:[%s213 + $0x78] sm:$0xff]
      %v1906 = vld [vmem:[%s213 + $0xb8] sm:$0xff]
      %v1907 = vld [vmem:[%s213 + $0xc0] sm:$0xff]
      %v1908 = vld [vmem:[%s213 + $0x100] sm:$0xff]
      %v1909 = vld [vmem:[%s213 + $0x108] sm:$0xff]
      %v1910 = vld [vmem:[%s213 + $0x148] sm:$0xff]
      %v1911 = vld [vmem:[%s213 + $0x150] sm:$0xff]
      %v1912 = vld [vmem:[%s213 + $0x190] sm:$0xff]
      %v1913 = vld [vmem:[%s213 + $0x198] sm:$0xff]
      %v1914 = vld [vmem:[%s213 + $0x1d8] sm:$0xff]
      %v1915 = vld [vmem:[%s213 + $0x1e0] sm:$0xff]
      %v1916 = vld [vmem:[%s213 + $0x220] sm:$0xff]
      %v1917 = vld [vmem:[%s213 + $0x228] sm:$0xff]
      %v1918 = vld [vmem:[%s213 + $0x268] sm:$0xff]
      %v1919 = vld [vmem:[%s213 + $0x270] sm:$0xff]
      %v1920 = vld [vmem:[%s213 + $0x2b0] sm:$0xff]
      %v1921 = vld [vmem:[%s213 + $0x2b8] sm:$0xff]
      %v1922 = vld [vmem:[%s213 + $0x2f8] sm:$0xff]
      %v1923 = vld [vmem:[%s213 + $0x300] sm:$0xff]
      %v1924 = vld [vmem:[%s213 + $0x340] sm:$0xff]
      %v1925 = vld [vmem:[%s213 + $0x348] sm:$0xff]
      %v1926 = vld [vmem:[%s213 + $0x388] sm:$0xff]
      %v1927 = vld [vmem:[%s213 + $0x390] sm:$0xff]
      %v1928 = vld [vmem:[%s213 + $0x3d0] sm:$0xff]
      %v1929 = vld [vmem:[%s213 + $0x3d8] sm:$0xff]
      %v1930 = vld [vmem:[%s213 + $0x418] sm:$0xff]
      %v1931 = vld [vmem:[%s213 + $0x420] sm:$0xff]
      %v1932 = vld [vmem:[%s213 + $0x460] sm:$0xff]
      %v1933 = vld [vmem:[%s213 + $0x468] sm:$0xff]
      %v1934 = vld [vmem:[%s213 + $0x38] sm:$0x1]
      %v1935 = vld [vmem:[%s213 + $0x80] sm:$0x1]
      %v1936 = vld [vmem:[%s213 + $0xc8] sm:$0x1]
      %v1937 = vld [vmem:[%s213 + $0x110] sm:$0x1]
      %v1938 = vld [vmem:[%s213 + $0x158] sm:$0x1]
      %v1939 = vld [vmem:[%s213 + $0x1a0] sm:$0x1]
      %v1940 = vld [vmem:[%s213 + $0x1e8] sm:$0x1]
      %v1941 = vld [vmem:[%s213 + $0x230] sm:$0x1]
      %v1942 = vld [vmem:[%s213 + $0x278] sm:$0x1]
      %v1943 = vld [vmem:[%s213 + $0x2c0] sm:$0x1]
      %v1944 = vld [vmem:[%s213 + $0x308] sm:$0x1]
      %v1945 = vld [vmem:[%s213 + $0x350] sm:$0x1]
      %v1946 = vld [vmem:[%s213 + $0x398] sm:$0x1]
      %v1947 = vld [vmem:[%s213 + $0x3e0] sm:$0x1]
      %v1948 = vld [vmem:[%s213 + $0x428] sm:$0x1]
      %v1949 = vld [vmem:[%s213 + $0x470] sm:$0x1]
      %1951 = vset.pattern.permute.xlu0 16
      %1952 = vperm.xlu0 %1951, %v1839
      %v1953 = vpop.permute.xlu0 %1952
      %1956 = vset.pattern.permute.xlu0 16
      %1957 = vperm.xlu0 %1956, %v1841
      %v1958 = vpop.permute.xlu0 %1957
      %1961 = vset.pattern.permute.xlu0 16
      %1962 = vperm.xlu0 %1961, %v1843
      %v1963 = vpop.permute.xlu0 %1962
      %1966 = vset.pattern.permute.xlu0 16
      %1967 = vperm.xlu0 %1966, %v1845
      %v1968 = vpop.permute.xlu0 %1967
      %1971 = vset.pattern.permute.xlu0 16
      %1972 = vperm.xlu0 %1971, %v1847
      %v1973 = vpop.permute.xlu0 %1972
      %1976 = vset.pattern.permute.xlu0 16
      %1977 = vperm.xlu0 %1976, %v1849
      %v1978 = vpop.permute.xlu0 %1977
      %1981 = vset.pattern.permute.xlu0 16
      %1982 = vperm.xlu0 %1981, %v1851
      %v1983 = vpop.permute.xlu0 %1982
      %1986 = vset.pattern.permute.xlu0 16
      %1987 = vperm.xlu0 %1986, %v1853
      %v1988 = vpop.permute.xlu0 %1987
      %1991 = vset.pattern.permute.xlu0 16
      %1992 = vperm.xlu0 %1991, %v1855
      %v1993 = vpop.permute.xlu0 %1992
      %1996 = vset.pattern.permute.xlu0 16
      %1997 = vperm.xlu0 %1996, %v1857
      %v1998 = vpop.permute.xlu0 %1997
      %2001 = vset.pattern.permute.xlu0 16
      %2002 = vperm.xlu0 %2001, %v1859
      %v2003 = vpop.permute.xlu0 %2002
      %2006 = vset.pattern.permute.xlu0 16
      %2007 = vperm.xlu0 %2006, %v1861
      %v2008 = vpop.permute.xlu0 %2007
      %2011 = vset.pattern.permute.xlu0 16
      %2012 = vperm.xlu0 %2011, %v1863
      %v2013 = vpop.permute.xlu0 %2012
      %2016 = vset.pattern.permute.xlu0 16
      %2017 = vperm.xlu0 %2016, %v1865
      %v2018 = vpop.permute.xlu0 %2017
      %2021 = vset.pattern.permute.xlu0 16
      %2022 = vperm.xlu0 %2021, %v1867
      %v2023 = vpop.permute.xlu0 %2022
      %2026 = vset.pattern.permute.xlu0 16
      %2027 = vperm.xlu0 %2026, %v1869
      %v2028 = vpop.permute.xlu0 %2027
      %2031 = vset.pattern.permute.xlu0 16
      %2032 = vperm.xlu0 %2031, %v1871
      %v2033 = vpop.permute.xlu0 %2032
      %2036 = vset.pattern.permute.xlu0 16
      %2037 = vperm.xlu0 %2036, %v1873
      %v2038 = vpop.permute.xlu0 %2037
      %2041 = vset.pattern.permute.xlu0 16
      %2042 = vperm.xlu0 %2041, %v1875
      %v2043 = vpop.permute.xlu0 %2042
      %2046 = vset.pattern.permute.xlu0 16
      %2047 = vperm.xlu0 %2046, %v1877
      %v2048 = vpop.permute.xlu0 %2047
      %2051 = vset.pattern.permute.xlu0 16
      %2052 = vperm.xlu0 %2051, %v1879
      %v2053 = vpop.permute.xlu0 %2052
      %2056 = vset.pattern.permute.xlu0 16
      %2057 = vperm.xlu0 %2056, %v1881
      %v2058 = vpop.permute.xlu0 %2057
      %2061 = vset.pattern.permute.xlu0 16
      %2062 = vperm.xlu0 %2061, %v1883
      %v2063 = vpop.permute.xlu0 %2062
      %2066 = vset.pattern.permute.xlu0 16
      %2067 = vperm.xlu0 %2066, %v1885
      %v2068 = vpop.permute.xlu0 %2067
      %2071 = vset.pattern.permute.xlu0 16
      %2072 = vperm.xlu0 %2071, %v1887
      %v2073 = vpop.permute.xlu0 %2072
      %2076 = vset.pattern.permute.xlu0 16
      %2077 = vperm.xlu0 %2076, %v1889
      %v2078 = vpop.permute.xlu0 %2077
      %2081 = vset.pattern.permute.xlu0 16
      %2082 = vperm.xlu0 %2081, %v1891
      %v2083 = vpop.permute.xlu0 %2082
      %2086 = vset.pattern.permute.xlu0 16
      %2087 = vperm.xlu0 %2086, %v1893
      %v2088 = vpop.permute.xlu0 %2087
      %2091 = vset.pattern.permute.xlu0 16
      %2092 = vperm.xlu0 %2091, %v1895
      %v2093 = vpop.permute.xlu0 %2092
      %2096 = vset.pattern.permute.xlu0 16
      %2097 = vperm.xlu0 %2096, %v1897
      %v2098 = vpop.permute.xlu0 %2097
      %2101 = vset.pattern.permute.xlu0 16
      %2102 = vperm.xlu0 %2101, %v1899
      %v2103 = vpop.permute.xlu0 %2102
      %2106 = vset.pattern.permute.xlu0 16
      %2107 = vperm.xlu0 %2106, %v1901
      %v2108 = vpop.permute.xlu0 %2107
      %v2110 = vmul.f32 %v1902, %v1953
      %v2111 = vmul.f32 %v1903, %v1958
      %v2112 = vmul.f32 %v1904, %v1963
      %v2113 = vmul.f32 %v1905, %v1968
      %v2114 = vmul.f32 %v1906, %v1973
      %v2115 = vmul.f32 %v1907, %v1978
      %v2116 = vmul.f32 %v1908, %v1983
      %v2117 = vmul.f32 %v1909, %v1988
      %v2118 = vmul.f32 %v1910, %v1993
      %v2119 = vmul.f32 %v1911, %v1998
      %v2120 = vmul.f32 %v1912, %v2003
      %v2121 = vmul.f32 %v1913, %v2008
      %v2122 = vmul.f32 %v1914, %v2013
      %v2123 = vmul.f32 %v1915, %v2018
      %v2124 = vmul.f32 %v1916, %v2023
      %v2125 = vmul.f32 %v1917, %v2028
      %v2126 = vmul.f32 %v1918, %v2033
      %v2127 = vmul.f32 %v1919, %v2038
      %v2128 = vmul.f32 %v1920, %v2043
      %v2129 = vmul.f32 %v1921, %v2048
      %v2130 = vmul.f32 %v1922, %v2053
      %v2131 = vmul.f32 %v1923, %v2058
      %v2132 = vmul.f32 %v1924, %v2063
      %v2133 = vmul.f32 %v1925, %v2068
      %v2134 = vmul.f32 %v1926, %v2073
      %v2135 = vmul.f32 %v1927, %v2078
      %v2136 = vmul.f32 %v1928, %v2083
      %v2137 = vmul.f32 %v1929, %v2088
      %v2138 = vmul.f32 %v1930, %v2093
      %v2139 = vmul.f32 %v1931, %v2098
      %v2140 = vmul.f32 %v1932, %v2103
      %v2141 = vmul.f32 %v1933, %v2108
      %vm2142 = vcmask 64512
      %v2143 = vsel %vm2142, %v2110, 0.0
      %v2144 = vsel %vm2142, %v2111, 0.0
      %v2145 = vadd.f32 %v2143, %v2144
      %v2146 = vrot.slane %v2145, 4
      %v2147 = vadd.f32 %v2145, %v2146
      %v2148 = vrot.slane %v2147, 2
      %v2149 = vadd.f32 %v2147, %v2148
      %v2150 = vrot.slane %v2149, 1
      %v2151 = vadd.f32 %v2149, %v2150
      %v2152 = vsel %vm2142, %v2112, 0.0
      %v2153 = vsel %vm2142, %v2113, 0.0
      %v2154 = vadd.f32 %v2152, %v2153
      %v2155 = vrot.slane %v2154, 4
      %v2156 = vadd.f32 %v2154, %v2155
      %v2157 = vrot.slane %v2156, 2
      %v2158 = vadd.f32 %v2156, %v2157
      %v2159 = vrot.slane %v2158, 1
      %v2160 = vadd.f32 %v2158, %v2159
      %v2161 = vsel %vm2142, %v2114, 0.0
      %v2162 = vsel %vm2142, %v2115, 0.0
      %v2163 = vadd.f32 %v2161, %v2162
      %v2164 = vrot.slane %v2163, 4
      %v2165 = vadd.f32 %v2163, %v2164
      %v2166 = vrot.slane %v2165, 2
      %v2167 = vadd.f32 %v2165, %v2166
      %v2168 = vrot.slane %v2167, 1
      %v2169 = vadd.f32 %v2167, %v2168
      %v2170 = vsel %vm2142, %v2116, 0.0
      %v2171 = vsel %vm2142, %v2117, 0.0
      %v2172 = vadd.f32 %v2170, %v2171
      %v2173 = vrot.slane %v2172, 4
      %v2174 = vadd.f32 %v2172, %v2173
      %v2175 = vrot.slane %v2174, 2
      %v2176 = vadd.f32 %v2174, %v2175
      %v2177 = vrot.slane %v2176, 1
      %v2178 = vadd.f32 %v2176, %v2177
      %v2179 = vsel %vm2142, %v2118, 0.0
      %v2180 = vsel %vm2142, %v2119, 0.0
      %v2181 = vadd.f32 %v2179, %v2180
      %v2182 = vrot.slane %v2181, 4
      %v2183 = vadd.f32 %v2181, %v2182
      %v2184 = vrot.slane %v2183, 2
      %v2185 = vadd.f32 %v2183, %v2184
      %v2186 = vrot.slane %v2185, 1
      %v2187 = vadd.f32 %v2185, %v2186
      %v2188 = vsel %vm2142, %v2120, 0.0
      %v2189 = vsel %vm2142, %v2121, 0.0
      %v2190 = vadd.f32 %v2188, %v2189
      %v2191 = vrot.slane %v2190, 4
      %v2192 = vadd.f32 %v2190, %v2191
      %v2193 = vrot.slane %v2192, 2
      %v2194 = vadd.f32 %v2192, %v2193
      %v2195 = vrot.slane %v2194, 1
      %v2196 = vadd.f32 %v2194, %v2195
      %v2197 = vsel %vm2142, %v2122, 0.0
      %v2198 = vsel %vm2142, %v2123, 0.0
      %v2199 = vadd.f32 %v2197, %v2198
      %v2200 = vrot.slane %v2199, 4
      %v2201 = vadd.f32 %v2199, %v2200
      %v2202 = vrot.slane %v2201, 2
      %v2203 = vadd.f32 %v2201, %v2202
      %v2204 = vrot.slane %v2203, 1
      %v2205 = vadd.f32 %v2203, %v2204
      %v2206 = vsel %vm2142, %v2124, 0.0
      %v2207 = vsel %vm2142, %v2125, 0.0
      %v2208 = vadd.f32 %v2206, %v2207
      %v2209 = vrot.slane %v2208, 4
      %v2210 = vadd.f32 %v2208, %v2209
      %v2211 = vrot.slane %v2210, 2
      %v2212 = vadd.f32 %v2210, %v2211
      %v2213 = vrot.slane %v2212, 1
      %v2214 = vadd.f32 %v2212, %v2213
      %v2215 = vsel %vm2142, %v2126, 0.0
      %v2216 = vsel %vm2142, %v2127, 0.0
      %v2217 = vadd.f32 %v2215, %v2216
      %v2218 = vrot.slane %v2217, 4
      %v2219 = vadd.f32 %v2217, %v2218
      %v2220 = vrot.slane %v2219, 2
      %v2221 = vadd.f32 %v2219, %v2220
      %v2222 = vrot.slane %v2221, 1
      %v2223 = vadd.f32 %v2221, %v2222
      %v2224 = vsel %vm2142, %v2128, 0.0
      %v2225 = vsel %vm2142, %v2129, 0.0
      %v2226 = vadd.f32 %v2224, %v2225
      %v2227 = vrot.slane %v2226, 4
      %v2228 = vadd.f32 %v2226, %v2227
      %v2229 = vrot.slane %v2228, 2
      %v2230 = vadd.f32 %v2228, %v2229
      %v2231 = vrot.slane %v2230, 1
      %v2232 = vadd.f32 %v2230, %v2231
      %v2233 = vsel %vm2142, %v2130, 0.0
      %v2234 = vsel %vm2142, %v2131, 0.0
      %v2235 = vadd.f32 %v2233, %v2234
      %v2236 = vrot.slane %v2235, 4
      %v2237 = vadd.f32 %v2235, %v2236
      %v2238 = vrot.slane %v2237, 2
      %v2239 = vadd.f32 %v2237, %v2238
      %v2240 = vrot.slane %v2239, 1
      %v2241 = vadd.f32 %v2239, %v2240
      %v2242 = vsel %vm2142, %v2132, 0.0
      %v2243 = vsel %vm2142, %v2133, 0.0
      %v2244 = vadd.f32 %v2242, %v2243
      %v2245 = vrot.slane %v2244, 4
      %v2246 = vadd.f32 %v2244, %v2245
      %v2247 = vrot.slane %v2246, 2
      %v2248 = vadd.f32 %v2246, %v2247
      %v2249 = vrot.slane %v2248, 1
      %v2250 = vadd.f32 %v2248, %v2249
      %v2251 = vsel %vm2142, %v2134, 0.0
      %v2252 = vsel %vm2142, %v2135, 0.0
      %v2253 = vadd.f32 %v2251, %v2252
      %v2254 = vrot.slane %v2253, 4
      %v2255 = vadd.f32 %v2253, %v2254
      %v2256 = vrot.slane %v2255, 2
      %v2257 = vadd.f32 %v2255, %v2256
      %v2258 = vrot.slane %v2257, 1
      %v2259 = vadd.f32 %v2257, %v2258
      %v2260 = vsel %vm2142, %v2136, 0.0
      %v2261 = vsel %vm2142, %v2137, 0.0
      %v2262 = vadd.f32 %v2260, %v2261
      %v2263 = vrot.slane %v2262, 4
      %v2264 = vadd.f32 %v2262, %v2263
      %v2265 = vrot.slane %v2264, 2
      %v2266 = vadd.f32 %v2264, %v2265
      %v2267 = vrot.slane %v2266, 1
      %v2268 = vadd.f32 %v2266, %v2267
      %v2269 = vsel %vm2142, %v2138, 0.0
      %v2270 = vsel %vm2142, %v2139, 0.0
      %v2271 = vadd.f32 %v2269, %v2270
      %v2272 = vrot.slane %v2271, 4
      %v2273 = vadd.f32 %v2271, %v2272
      %v2274 = vrot.slane %v2273, 2
      %v2275 = vadd.f32 %v2273, %v2274
      %v2276 = vrot.slane %v2275, 1
      %v2277 = vadd.f32 %v2275, %v2276
      %v2278 = vsel %vm2142, %v2140, 0.0
      %v2279 = vsel %vm2142, %v2141, 0.0
      %v2280 = vadd.f32 %v2278, %v2279
      %v2281 = vrot.slane %v2280, 4
      %v2282 = vadd.f32 %v2280, %v2281
      %v2283 = vrot.slane %v2282, 2
      %v2284 = vadd.f32 %v2282, %v2283
      %v2285 = vrot.slane %v2284, 1
      %v2286 = vadd.f32 %v2284, %v2285
      %v2287 = vadd.f32 %v2151, %v1934
      %v2288 = vadd.f32 %v2160, %v1935
      %v2289 = vadd.f32 %v2169, %v1936
      %v2290 = vadd.f32 %v2178, %v1937
      %v2291 = vadd.f32 %v2187, %v1938
      %v2292 = vadd.f32 %v2196, %v1939
      %v2293 = vadd.f32 %v2205, %v1940
      %v2294 = vadd.f32 %v2214, %v1941
      %v2295 = vadd.f32 %v2223, %v1942
      %v2296 = vadd.f32 %v2232, %v1943
      %v2297 = vadd.f32 %v2241, %v1944
      %v2298 = vadd.f32 %v2250, %v1945
      %v2299 = vadd.f32 %v2259, %v1946
      %v2300 = vadd.f32 %v2268, %v1947
      %v2301 = vadd.f32 %v2277, %v1948
      %v2302 = vadd.f32 %v2286, %v1949
      %v2303 = vand.u32 2147483647, %v2287
      %v2304 = vand.u32 2147483647, %v2288
      %v2305 = vand.u32 2147483647, %v2289
      %v2306 = vand.u32 2147483647, %v2290
      %v2307 = vand.u32 2147483647, %v2291
      %v2308 = vand.u32 2147483647, %v2292
      %v2309 = vand.u32 2147483647, %v2293
      %v2310 = vand.u32 2147483647, %v2294
      %v2311 = vand.u32 2147483647, %v2295
      %v2312 = vand.u32 2147483647, %v2296
      %v2313 = vand.u32 2147483647, %v2297
      %v2314 = vand.u32 2147483647, %v2298
      %v2315 = vand.u32 2147483647, %v2299
      %v2316 = vand.u32 2147483647, %v2300
      %v2317 = vand.u32 2147483647, %v2301
      %v2318 = vand.u32 2147483647, %v2302
      %v2319 = vsub.f32 0.0, %v2303
      %v2320 = vsub.f32 0.0, %v2304
      %v2321 = vsub.f32 0.0, %v2305
      %v2322 = vsub.f32 0.0, %v2306
      %v2323 = vsub.f32 0.0, %v2307
      %v2324 = vsub.f32 0.0, %v2308
      %v2325 = vsub.f32 0.0, %v2309
      %v2326 = vsub.f32 0.0, %v2310
      %v2327 = vsub.f32 0.0, %v2311
      %v2328 = vsub.f32 0.0, %v2312
      %v2329 = vsub.f32 0.0, %v2313
      %v2330 = vsub.f32 0.0, %v2314
      %v2331 = vsub.f32 0.0, %v2315
      %v2332 = vsub.f32 0.0, %v2316
      %v2333 = vsub.f32 0.0, %v2317
      %v2334 = vsub.f32 0.0, %v2318
      %v2335 = vmul.f32 %v2319, 1.442695
      %v2336 = vpow.pop %v2335
      %v2337 = vmul.f32 %v2320, 1.442695
      %v2338 = vpow.pop %v2337
      %v2339 = vmul.f32 %v2321, 1.442695
      %v2340 = vpow.pop %v2339
      %v2341 = vmul.f32 %v2322, 1.442695
      %v2342 = vpow.pop %v2341
      %v2343 = vmul.f32 %v2323, 1.442695
      %v2344 = vpow.pop %v2343
      %v2345 = vmul.f32 %v2324, 1.442695
      %v2346 = vpow.pop %v2345
      %v2347 = vmul.f32 %v2325, 1.442695
      %v2348 = vpow.pop %v2347
      %v2349 = vmul.f32 %v2326, 1.442695
      %v2350 = vpow.pop %v2349
      %v2351 = vmul.f32 %v2327, 1.442695
      %v2352 = vpow.pop %v2351
      %v2353 = vmul.f32 %v2328, 1.442695
      %v2354 = vpow.pop %v2353
      %v2355 = vmul.f32 %v2329, 1.442695
      %v2356 = vpow.pop %v2355
      %v2357 = vmul.f32 %v2330, 1.442695
      %v2358 = vpow.pop %v2357
      %v2359 = vmul.f32 %v2331, 1.442695
      %v2360 = vpow.pop %v2359
      %v2361 = vmul.f32 %v2332, 1.442695
      %v2362 = vpow.pop %v2361
      %v2363 = vmul.f32 %v2333, 1.442695
      %v2364 = vpow.pop %v2363
      %v2365 = vmul.f32 %v2334, 1.442695
      %v2366 = vpow.pop %v2365
      %vm2367 = vcmp.ge.f32.partialorder %v2287, 0.0
      %vm2368 = vcmp.ge.f32.partialorder %v2288, 0.0
      %vm2369 = vcmp.ge.f32.partialorder %v2289, 0.0
      %vm2370 = vcmp.ge.f32.partialorder %v2290, 0.0
      %vm2371 = vcmp.ge.f32.partialorder %v2291, 0.0
      %vm2372 = vcmp.ge.f32.partialorder %v2292, 0.0
      %vm2373 = vcmp.ge.f32.partialorder %v2293, 0.0
      %vm2374 = vcmp.ge.f32.partialorder %v2294, 0.0
      %vm2375 = vcmp.ge.f32.partialorder %v2295, 0.0
      %vm2376 = vcmp.ge.f32.partialorder %v2296, 0.0
      %vm2377 = vcmp.ge.f32.partialorder %v2297, 0.0
      %vm2378 = vcmp.ge.f32.partialorder %v2298, 0.0
      %vm2379 = vcmp.ge.f32.partialorder %v2299, 0.0
      %vm2380 = vcmp.ge.f32.partialorder %v2300, 0.0
      %vm2381 = vcmp.ge.f32.partialorder %v2301, 0.0
      %vm2382 = vcmp.ge.f32.partialorder %v2302, 0.0
      %v2383 = vsel %vm2367, 1.0, %v2336
      %v2384 = vsel %vm2368, 1.0, %v2338
      %v2385 = vsel %vm2369, 1.0, %v2340
      %v2386 = vsel %vm2370, 1.0, %v2342
      %v2387 = vsel %vm2371, 1.0, %v2344
      %v2388 = vsel %vm2372, 1.0, %v2346
      %v2389 = vsel %vm2373, 1.0, %v2348
      %v2390 = vsel %vm2374, 1.0, %v2350
      %v2391 = vsel %vm2375, 1.0, %v2352
      %v2392 = vsel %vm2376, 1.0, %v2354
      %v2393 = vsel %vm2377, 1.0, %v2356
      %v2394 = vsel %vm2378, 1.0, %v2358
      %v2395 = vsel %vm2379, 1.0, %v2360
      %v2396 = vsel %vm2380, 1.0, %v2362
      %v2397 = vsel %vm2381, 1.0, %v2364
      %v2398 = vsel %vm2382, 1.0, %v2366
      %v2399 = vadd.f32 %v2336, 1.0
      %v2400 = vadd.f32 %v2338, 1.0
      %v2401 = vadd.f32 %v2340, 1.0
      %v2402 = vadd.f32 %v2342, 1.0
      %v2403 = vadd.f32 %v2344, 1.0
      %v2404 = vadd.f32 %v2346, 1.0
      %v2405 = vadd.f32 %v2348, 1.0
      %v2406 = vadd.f32 %v2350, 1.0
      %v2407 = vadd.f32 %v2352, 1.0
      %v2408 = vadd.f32 %v2354, 1.0
      %v2409 = vadd.f32 %v2356, 1.0
      %v2410 = vadd.f32 %v2358, 1.0
      %v2411 = vadd.f32 %v2360, 1.0
      %v2412 = vadd.f32 %v2362, 1.0
      %v2413 = vadd.f32 %v2364, 1.0
      %v2414 = vadd.f32 %v2366, 1.0
      %v2415 = vrcp.pop %v2399
      %v2416 = vmul.f32 %v2383, %v2415
      %v2417 = vrcp.pop %v2400
      %v2418 = vmul.f32 %v2384, %v2417
      %v2419 = vrcp.pop %v2401
      %v2420 = vmul.f32 %v2385, %v2419
      %v2421 = vrcp.pop %v2402
      %v2422 = vmul.f32 %v2386, %v2421
      %v2423 = vrcp.pop %v2403
      %v2424 = vmul.f32 %v2387, %v2423
      %v2425 = vrcp.pop %v2404
      %v2426 = vmul.f32 %v2388, %v2425
      %v2427 = vrcp.pop %v2405
      %v2428 = vmul.f32 %v2389, %v2427
      %v2429 = vrcp.pop %v2406
      %v2430 = vmul.f32 %v2390, %v2429
      %v2431 = vrcp.pop %v2407
      %v2432 = vmul.f32 %v2391, %v2431
      %v2433 = vrcp.pop %v2408
      %v2434 = vmul.f32 %v2392, %v2433
      %v2435 = vrcp.pop %v2409
      %v2436 = vmul.f32 %v2393, %v2435
      %v2437 = vrcp.pop %v2410
      %v2438 = vmul.f32 %v2394, %v2437
      %v2439 = vrcp.pop %v2411
      %v2440 = vmul.f32 %v2395, %v2439
      %v2441 = vrcp.pop %v2412
      %v2442 = vmul.f32 %v2396, %v2441
      %v2443 = vrcp.pop %v2413
      %v2444 = vmul.f32 %v2397, %v2443
      %v2445 = vrcp.pop %v2414
      %v2446 = vmul.f32 %v2398, %v2445
      %v2447 = vld [vmem:[%s213 + $0x40] sm:$0x1]
      %v2448 = vld [vmem:[%s213 + $0x88] sm:$0x1]
      %v2449 = vld [vmem:[%s213 + $0xd0] sm:$0x1]
      %v2450 = vld [vmem:[%s213 + $0x118] sm:$0x1]
      %v2451 = vld [vmem:[%s213 + $0x160] sm:$0x1]
      %v2452 = vld [vmem:[%s213 + $0x1a8] sm:$0x1]
      %v2453 = vld [vmem:[%s213 + $0x1f0] sm:$0x1]
      %v2454 = vld [vmem:[%s213 + $0x238] sm:$0x1]
      %v2455 = vld [vmem:[%s213 + $0x280] sm:$0x1]
      %v2456 = vld [vmem:[%s213 + $0x2c8] sm:$0x1]
      %v2457 = vld [vmem:[%s213 + $0x310] sm:$0x1]
      %v2458 = vld [vmem:[%s213 + $0x358] sm:$0x1]
      %v2459 = vld [vmem:[%s213 + $0x3a0] sm:$0x1]
      %v2460 = vld [vmem:[%s213 + $0x3e8] sm:$0x1]
      %v2461 = vld [vmem:[%s213 + $0x430] sm:$0x1]
      %v2462 = vld [vmem:[%s213 + $0x478] sm:$0x1]
      %v2463 = vmul.f32 %v2447, %v2416
      %v2464 = vmul.f32 %v2448, %v2418
      %v2465 = vmul.f32 %v2449, %v2420
      %v2466 = vmul.f32 %v2450, %v2422
      %v2467 = vmul.f32 %v2451, %v2424
      %v2468 = vmul.f32 %v2452, %v2426
      %v2469 = vmul.f32 %v2453, %v2428
      %v2470 = vmul.f32 %v2454, %v2430
      %v2471 = vmul.f32 %v2455, %v2432
      %v2472 = vmul.f32 %v2456, %v2434
      %v2473 = vmul.f32 %v2457, %v2436
      %v2474 = vmul.f32 %v2458, %v2438
      %v2475 = vmul.f32 %v2459, %v2440
      %v2476 = vmul.f32 %v2460, %v2442
      %v2477 = vmul.f32 %v2461, %v2444
      %v2478 = vmul.f32 %v2462, %v2446
      %vm2479 = vcmask 57344
      %v2480 = vsel %vm2479, %v2463, 0.0
      %2481 = vadd.xlane.f32.xlu0 %v2480
      %v2482 = vpop.xlane.xlu0 %2481
      %v2483 = vsel %vm2479, %v2464, 0.0
      %2484 = vadd.xlane.f32.xlu0 %v2483
      %v2485 = vpop.xlane.xlu0 %2484
      %v2486 = vsel %vm2479, %v2465, 0.0
      %2487 = vadd.xlane.f32.xlu0 %v2486
      %v2488 = vpop.xlane.xlu0 %2487
      %v2489 = vsel %vm2479, %v2466, 0.0
      %2490 = vadd.xlane.f32.xlu0 %v2489
      %v2491 = vpop.xlane.xlu0 %2490
      %v2492 = vsel %vm2479, %v2467, 0.0
      %2493 = vadd.xlane.f32.xlu0 %v2492
      %v2494 = vpop.xlane.xlu0 %2493
      %v2495 = vsel %vm2479, %v2468, 0.0
      %2496 = vadd.xlane.f32.xlu0 %v2495
      %v2497 = vpop.xlane.xlu0 %2496
      %v2498 = vsel %vm2479, %v2469, 0.0
      %2499 = vadd.xlane.f32.xlu0 %v2498
      %v2500 = vpop.xlane.xlu0 %2499
      %v2501 = vsel %vm2479, %v2470, 0.0
      %2502 = vadd.xlane.f32.xlu0 %v2501
      %v2503 = vpop.xlane.xlu0 %2502
      %v2504 = vsel %vm2479, %v2471, 0.0
      %2505 = vadd.xlane.f32.xlu0 %v2504
      %v2506 = vpop.xlane.xlu0 %2505
      %v2507 = vsel %vm2479, %v2472, 0.0
      %2508 = vadd.xlane.f32.xlu0 %v2507
      %v2509 = vpop.xlane.xlu0 %2508
      %v2510 = vsel %vm2479, %v2473, 0.0
      %2511 = vadd.xlane.f32.xlu0 %v2510
      %v2512 = vpop.xlane.xlu0 %2511
      %v2513 = vsel %vm2479, %v2474, 0.0
      %2514 = vadd.xlane.f32.xlu0 %v2513
      %v2515 = vpop.xlane.xlu0 %2514
      %v2516 = vsel %vm2479, %v2475, 0.0
      %2517 = vadd.xlane.f32.xlu0 %v2516
      %v2518 = vpop.xlane.xlu0 %2517
      %v2519 = vsel %vm2479, %v2476, 0.0
      %2520 = vadd.xlane.f32.xlu0 %v2519
      %v2521 = vpop.xlane.xlu0 %2520
      %v2522 = vsel %vm2479, %v2477, 0.0
      %2523 = vadd.xlane.f32.xlu0 %v2522
      %v2524 = vpop.xlane.xlu0 %2523
      %v2525 = vsel %vm2479, %v2478, 0.0
      %2526 = vadd.xlane.f32.xlu0 %v2525
      %v2527 = vpop.xlane.xlu0 %2526
      %v2528 = vadd.f32 %v2482, %v2447
      %v2529 = vadd.f32 %v2485, %v2448
      %v2530 = vadd.f32 %v2488, %v2449
      %v2531 = vadd.f32 %v2491, %v2450
      %v2532 = vadd.f32 %v2494, %v2451
      %v2533 = vadd.f32 %v2497, %v2452
      %v2534 = vadd.f32 %v2500, %v2453
      %v2535 = vadd.f32 %v2503, %v2454
      %v2536 = vadd.f32 %v2506, %v2455
      %v2537 = vadd.f32 %v2509, %v2456
      %v2538 = vadd.f32 %v2512, %v2457
      %v2539 = vadd.f32 %v2515, %v2458
      %v2540 = vadd.f32 %v2518, %v2459
      %v2541 = vadd.f32 %v2521, %v2460
      %v2542 = vadd.f32 %v2524, %v2461
      %v2543 = vadd.f32 %v2527, %v2462
      %v2560 = vrot.slane %v2529, 7
      %vm2561 = vcmask 1041409
      %v2562 = vsel %vm2561, %v2560, %v2528
      %v2563 = vrot.slane %v2530, 6
      %vm2564 = vcmask 1042434
      %v2565 = vsel %vm2564, %v2563, %v2562
      %v2566 = vrot.slane %v2531, 5
      %vm2567 = vcmask 1043459
      %v2568 = vsel %vm2567, %v2566, %v2565
      %v2569 = vrot.slane %v2532, 4
      %vm2570 = vcmask 1044484
      %v2571 = vsel %vm2570, %v2569, %v2568
      %v2572 = vrot.slane %v2533, 3
      %vm2573 = vcmask 1045509
      %v2574 = vsel %vm2573, %v2572, %v2571
      %v2575 = vrot.slane %v2534, 2
      %vm2576 = vcmask 1046534
      %v2577 = vsel %vm2576, %v2575, %v2574
      %v2578 = vrot.slane %v2535, 1
      %vm2579 = vcmask 1047559
      %v2580 = vsel %vm2579, %v2578, %v2577
      %v2581 = vrot.slane %v2537, 7
      %v2582 = vsel %vm2561, %v2581, %v2536
      %v2583 = vrot.slane %v2538, 6
      %v2584 = vsel %vm2564, %v2583, %v2582
      %v2585 = vrot.slane %v2539, 5
      %v2586 = vsel %vm2567, %v2585, %v2584
      %v2587 = vrot.slane %v2540, 4
      %v2588 = vsel %vm2570, %v2587, %v2586
      %v2589 = vrot.slane %v2541, 3
      %v2590 = vsel %vm2573, %v2589, %v2588
      %v2591 = vrot.slane %v2542, 2
      %v2592 = vsel %vm2576, %v2591, %v2590
      %v2593 = vrot.slane %v2543, 1
      %v2594 = vsel %vm2579, %v2593, %v2592
      %2595 = vrot.lane.b32.xlu0 %v2580, 120
      %v2596 = vpop.permute.xlu0 %2595
      %2597 = vrot.lane.b32.xlu0 %v2594, 120
      %v2598 = vpop.permute.xlu0 %2597
      %vm2601 = vcmask 7168
      %2602 = vst.msk [vmem:[%s219] sm:$0xff] %vm2601, %v2596
      %2603 = vst.msk [vmem:[%s219 + $0x8] sm:$0xff] %vm2601, %v2598
      %p2604 = scmp.lt.s32.totalorder %s14, 1
      %s2605 = scalar_select %p2604, %s14, 1
      %s2606 = smul.addr %s2605, 2
      %s2607 = smul.addr %s2606, 8
      %s2608 = scalar_lea.vmem %s3, %s2607
      // Predicated region
      $region33: #{tpu_custom_call.1} parent=31 // pred_check
        %p2609 = pneg %p110
      $region34: #{tpu_custom_call.1} parent=31 // pred_check_branch
        %2611 = sbr.rel (%p2609) target = $region36
      $region35: #{tpu_custom_call.1} parent=31 // pred_region
        _
      $region36: #{tpu_custom_call.1} parent=31 // pred_fallthru
        _
    $region32: #{tpu_custom_call.1} parent=5 // pred_fallthru
      _
    %p2612 = scmp.le.s32.totalorder 2, %s9
    // Predicated region
    $region37: #{tpu_custom_call.1} parent=5 // pred_check
      %p2613 = pneg %p2612
    $region38: #{tpu_custom_call.1} parent=5 // pred_check_branch
      %2615 = sbr.rel (%p2613) target = $region40
    $region39: #{tpu_custom_call.1} parent=5 // pred_region
      %s2616 = ssub.s32 %s9, 2
      // Predicated region
      $region41: #{tpu_custom_call.1} parent=39 // pred_check
        %p2617 = pneg %p116
      $region42: #{tpu_custom_call.1} parent=39 // pred_check_branch
        %2619 = sbr.rel (%p2617) target = $region44
      $region43: #{tpu_custom_call.1} parent=39 // pred_region
        %p2620 = scmp.lt.s32.totalorder %s15, 1
        %s2621 = scalar_select %p2620, %s15, 1
        %s2622 = smul.addr %s2621, 2
        %s2623 = smul.addr %s2622, 8
        %s2624 = scalar_lea.vmem %s3, %s2623
      $region44: #{tpu_custom_call.1} parent=39 // pred_fallthru
        _
    $region40: #{tpu_custom_call.1} parent=5 // pred_fallthru
      _
  $region6: #{tpu_custom_call.1} parent=0 // loop_footer
    %s13 = sadd.s32 1, %s9
  $region7: #{tpu_custom_call.1} parent=0 // loop_footer_branch
    %8 = sbr.rel target = $region3
  $region8: #{tpu_custom_call.1} parent=0 // loop_exit
    _

</llo_original>
